<compile_context>
chip_gen: v5e
topology: v5e:2x2
jax: 0.10.0
libtpu: 0.0.40
codegen_flags: <defaults>
</compile_context>

<pallas_src>
import jax
import jax.numpy as jnp
from jax.experimental import pallas as pl
from jax.experimental.pallas import tpu as pltpu

EPS = 1e-5
TILE_M = 512          # 128-multiple; must be >= max flat tap offset 2*(H+2)(W+2)+2*(W+2)+2
BN_MAX_COLS = 16384   # BN-apply tile upper bound (per reviewer: 4K-16K columns)


# ------------------------------ Pallas kernels ------------------------------ #

def _make_conv_stats_kernel(tap_offsets):
    """Conv (folded-K matmul) + masked BN partial-stat kernel, taps gathered in-kernel."""

    def kernel(xa_ref, xb_ref, w_ref, mask_ref, z_ref, stat_ref):
        c_out, tile_m = z_ref.shape
        # Halo window over flat canvas columns [i*TM, (i+2)*TM).
        xwin = jnp.concatenate([xa_ref[...], xb_ref[...]], axis=1)        # (Cin, 2*TM) bf16
        # Fold the 27 taps into the contraction axis: X_T (27*Cin, TM) built from
        # statically shifted slices of the halo window (no HBM im2col).
        xcol = jnp.concatenate(
            [xwin[:, off:off + tile_m] for off in tap_offsets], axis=0)   # (27*Cin, TM)
        acc = jnp.dot(w_ref[...], xcol,
                      preferred_element_type=jnp.float32)                 # (Cout, TM) f32
        z_ref[...] = acc.astype(z_ref.dtype)
        # Masked BN partials (mask zeroes canvas-padding / wrapped junk columns).
        ym = acc * mask_ref[...]
        s1 = jnp.sum(ym, axis=1, keepdims=True)                           # (Cout, 1)
        s2 = jnp.sum(ym * acc, axis=1, keepdims=True)                     # (Cout, 1)
        stat_ref[...] = jnp.concatenate([s1, s2], axis=0).reshape(1, 2 * c_out, 1)

    return kernel


def _bn_relu_kernel(z_ref, scale_ref, shift_ref, o_ref):
    """Elementwise BN-apply + ReLU on one (Cout, bn_tile) tile."""
    o_ref[...] = jnp.maximum(
        z_ref[...] * scale_ref[...] + shift_ref[...], 0.0).astype(o_ref.dtype)


# --------------------------------- wrappers ---------------------------------- #

def _largest_group(n_tiles, tile_m, max_cols=BN_MAX_COLS):
    best = 1
    for g in range(1, n_tiles + 1):
        if n_tiles % g == 0 and g * tile_m <= max_cols:
            best = g
    return best


def _bn_relu_apply(z, scale, shift, bn_tile, out_dtype):
    c_out, m_cols = z.shape
    n_steps = m_cols // bn_tile
    return pl.pallas_call(
        _bn_relu_kernel,
        out_shape=jax.ShapeDtypeStruct((c_out, m_cols), out_dtype),
        grid_spec=pltpu.PrefetchScalarGridSpec(
            num_scalar_prefetch=0,
            grid=(n_steps,),
            in_specs=[
                pl.BlockSpec((c_out, bn_tile), lambda i: (0, i)),
                pl.BlockSpec((c_out, 1), lambda i: (0, 0)),
                pl.BlockSpec((c_out, 1), lambda i: (0, 0)),
            ],
            out_specs=pl.BlockSpec((c_out, bn_tile), lambda i: (0, i)),
        ),
        compiler_params=pltpu.CompilerParams(
            dimension_semantics=("parallel",)),
    )(z, scale, shift)


def _conv_bn_relu(x_cn, w, out_dtype, tile_m=TILE_M):
    """One Conv3d(k3,p1,no-bias) + BatchNorm3d(batch stats) + ReLU block.

    x_cn: (Cin, N, D, H, W) channels-first-flat. Returns (Cout, N, D, H, W) in out_dtype.
    """
    c_in, n, d, h, wd = x_cn.shape
    c_out = w.shape[0]
    m_true = n * d * h * wd

    sd, sh = (h + 2) * (wd + 2), (wd + 2)
    m_canvas = n * (d + 2) * sd
    tap_offsets = tuple(kd * sd + kh * sh + kw
                        for kd in range(3) for kh in range(3) for kw in range(3))
    max_off = tap_offsets[-1]
    assert tile_m % 128 == 0 and tile_m >= max_off, (tile_m, max_off)

    n_tiles = pl.cdiv(m_canvas, tile_m)
    m_cols = n_tiles * tile_m

    # Zero-padded canvas (pad=1) flattened to (Cin, Mp); one extra TILE_M of zero columns
    # so the halo block (i+1) of the last tile is in-bounds.  bf16 operands for the MXU.
    canvas = jnp.pad(x_cn, ((0, 0), (0, 0), (1, 1), (1, 1), (1, 1))).reshape(c_in, m_canvas)
    xf = jnp.pad(canvas, ((0, 0), (0, m_cols + tile_m - m_canvas))).astype(jnp.bfloat16)

    # PyTorch Conv3d weight (Cout, Cin, 3,3,3) -> (Cout, 27*Cin), tap-major K, bf16.
    w_t = jnp.transpose(w, (0, 2, 3, 4, 1)).reshape(c_out, 27 * c_in).astype(jnp.bfloat16)

    # Validity mask of each canvas column (1.0 = real output position).
    mask = jnp.pad(jnp.ones((n, d, h, wd), jnp.float32),
                   ((0, 0), (0, 2), (0, 2), (0, 2))).reshape(1, m_canvas)
    mask = jnp.pad(mask, ((0, 0), (0, m_cols - m_canvas)))

    inter_dtype = jnp.bfloat16 if out_dtype == jnp.bfloat16 else jnp.float32

    z, stats = pl.pallas_call(
        _make_conv_stats_kernel(tap_offsets),
        out_shape=(jax.ShapeDtypeStruct((c_out, m_cols), inter_dtype),
                   jax.ShapeDtypeStruct((n_tiles, 2 * c_out, 1), jnp.float32)),
        grid_spec=pltpu.PrefetchScalarGridSpec(
            num_scalar_prefetch=0,
            grid=(n_tiles,),
            in_specs=[
                pl.BlockSpec((c_in, tile_m), lambda i: (0, i)),        # tile i
                pl.BlockSpec((c_in, tile_m), lambda i: (0, i + 1)),    # halo tile i+1
                # TODO(synk): pipeline_mode=pl.Buffered(1) here once Cout*27*Cin is large.
                pl.BlockSpec((c_out, 27 * c_in), lambda i: (0, 0)),
                pl.BlockSpec((1, tile_m), lambda i: (0, i)),
            ],
            out_specs=[
                pl.BlockSpec((c_out, tile_m), lambda i: (0, i)),
                pl.BlockSpec((1, 2 * c_out, 1), lambda i: (i, 0, 0)),
            ],
        ),
        compiler_params=pltpu.CompilerParams(
            dimension_semantics=("parallel",)),
    )(xf, xf, w_t, mask)

    # Finalize BN statistics in f32 (divide by the TRUE element count).
    totals = jnp.sum(stats[:, :, 0], axis=0)                       # (2*Cout,)
    mean = totals[:c_out] / m_true
    var = totals[c_out:] / m_true - mean * mean                    # biased, torch BN (train)
    scale = jax.lax.rsqrt(var + EPS)                               # gamma = 1
    shift = -mean * scale                                          # beta = 0

    bn_tile = tile_m * _largest_group(n_tiles, tile_m)
    a = _bn_relu_apply(z, scale.reshape(c_out, 1), shift.reshape(c_out, 1),
                       bn_tile, out_dtype)

    # Extract the valid output positions back to (Cout, N, D, H, W).
    a = a[:, :m_canvas].reshape(c_out, n, d + 2, h + 2, wd + 2)[:, :, :d, :h, :wd]
    return a


@jax.jit
def double_conv3d(x_ncdhw, w1, w2):
    """Forward of DoubleConv3D. x: (N, Cin, D, H, W) -> (N, Cout, D, H, W)."""
    x_cn = jnp.transpose(x_ncdhw, (1, 0, 2, 3, 4))                 # channels-first-flat once
    y1 = _conv_bn_relu(x_cn, w1, jnp.bfloat16)                     # bf16 intermediate
    y2 = _conv_bn_relu(y1, w2, jnp.float32)                        # final block in f32
    return jnp.transpose(y2, (1, 0, 2, 3, 4))


# ----------------------------- pure-JAX references ---------------------------- #

def _ref_block(x, w, bf16_operands):
    if bf16_operands:
        y = jax.lax.conv_general_dilated(
            x.astype(jnp.bfloat16), w.astype(jnp.bfloat16),
            window_strides=(1, 1, 1), padding=[(1, 1)] * 3,
            dimension_numbers=("NCDHW", "OIDHW", "NCDHW"),
            preferred_element_type=jnp.float32)
    else:
        y = jax.lax.conv_general_dilated(
            x, w, window_strides=(1, 1, 1), padding=[(1, 1)] * 3,
            dimension_numbers=("NCDHW", "OIDHW", "NCDHW"))
    mean = y.mean(axis=(0, 2, 3, 4), keepdims=True)
    var = ((y - mean) ** 2).mean(axis=(0, 2, 3, 4), keepdims=True)
    return jnp.maximum((y - mean) * jax.lax.rsqrt(var + EPS), 0.0)


def ref_double_conv3d(x, w1, w2, bf16_operands=False):
    return _ref_block(_ref_block(x, w1, bf16_operands), w2, bf16_operands)


# ----------------------------------- main ------------------------------------ #

if __name__ == "__main__":
    N, Cin, Cout = 2, 4, 8
    D = H = W = 8

    key = jax.random.PRNGKey(0)
    kx, k1, k2 = jax.random.split(key, 3)
    x = jax.random.normal(kx, (N, Cin, D, H, W), dtype=jnp.float32)
    w1 = 0.1 * jax.random.normal(k1, (Cout, Cin, 3, 3, 3), dtype=jnp.float32)
    w2 = 0.1 * jax.random.normal(k2, (Cout, Cout, 3, 3, 3), dtype=jnp.float32)

    out = jax.block_until_ready(double_conv3d(x, w1, w2))
    assert out.shape == (N, Cout, D, H, W), out.shape

    # Primary check: mixed-precision reference (bf16 matmul operands, f32 accumulation),
    # matching the kernel's numerics.  Secondary loose check vs the pure-f32 module math.
    ref_mixed = ref_double_conv3d(x, w1, w2, bf16_operands=True)
    ref_f32 = ref_double_conv3d(x, w1, w2, bf16_operands=False)
    assert jnp.allclose(out, ref_mixed, rtol=3e-2, atol=3e-2), (
        float(jnp.max(jnp.abs(out - ref_mixed))))
    assert jnp.allclose(out, ref_f32, rtol=1e-1, atol=1e-1), (
        float(jnp.max(jnp.abs(out - ref_f32))))

    print("KERNEL_OK")
</pallas_src>

<mosaic_0001>
module attributes {stable_mosaic.version = 11 : i64} {
  func.func @kernel(%arg0: i32, %arg1: memref<4x512xbf16, #tpu.memory_space<vmem>>, %arg2: memref<4x512xbf16, #tpu.memory_space<vmem>>, %arg3: memref<8x108xbf16, #tpu.memory_space<vmem>>, %arg4: memref<1x512xf32, #tpu.memory_space<vmem>>, %arg5: memref<8x512xbf16, #tpu.memory_space<vmem>>, %arg6: memref<1x16x1xf32, #tpu.memory_space<vmem>>) attributes {dimension_semantics = [#tpu.dimension_semantics<parallel>], iteration_bounds = array<i64: 4>, scalar_prefetch = 0 : i64, scratch_operands = 0 : i64, tpu.core_type = #tpu.core_type<tc>, window_params = [{transform_indices = @transform_0, window_bounds = array<i64: 4, 512>}, {transform_indices = @transform_1, window_bounds = array<i64: 4, 512>}, {pipeline_mode = #tpu.pipeline_mode<synchronous>, transform_indices = @transform_2, window_bounds = array<i64: 8, 108>}, {transform_indices = @transform_3, window_bounds = array<i64: 1, 512>}, {transform_indices = @transform_4, window_bounds = array<i64: 8, 512>}, {transform_indices = @transform_5, window_bounds = array<i64: 1, 16, 1>}]} {
    %c0 = arith.constant 0 : index
    %c0_0 = arith.constant 0 : index
    %0 = vector.load %arg1[%c0, %c0_0] : memref<4x512xbf16, #tpu.memory_space<vmem>>, vector<4x512xbf16>
    %c0_1 = arith.constant 0 : index
    %c0_2 = arith.constant 0 : index
    %1 = vector.load %arg2[%c0_1, %c0_2] : memref<4x512xbf16, #tpu.memory_space<vmem>>, vector<4x512xbf16>
    %2 = tpu.concatenate %0, %1 in 1 : vector<4x512xbf16>, vector<4x512xbf16> -> vector<4x1024xbf16>
    %3 = vector.extract_strided_slice %2 {offsets = [0, 0], sizes = [4, 512], strides = [1, 1]} : vector<4x1024xbf16> to vector<4x512xbf16>
    %4 = vector.extract_strided_slice %2 {offsets = [0, 1], sizes = [4, 512], strides = [1, 1]} : vector<4x1024xbf16> to vector<4x512xbf16>
    %5 = vector.extract_strided_slice %2 {offsets = [0, 2], sizes = [4, 512], strides = [1, 1]} : vector<4x1024xbf16> to vector<4x512xbf16>
    %6 = vector.extract_strided_slice %2 {offsets = [0, 10], sizes = [4, 512], strides = [1, 1]} : vector<4x1024xbf16> to vector<4x512xbf16>
    %7 = vector.extract_strided_slice %2 {offsets = [0, 11], sizes = [4, 512], strides = [1, 1]} : vector<4x1024xbf16> to vector<4x512xbf16>
    %8 = vector.extract_strided_slice %2 {offsets = [0, 12], sizes = [4, 512], strides = [1, 1]} : vector<4x1024xbf16> to vector<4x512xbf16>
    %9 = vector.extract_strided_slice %2 {offsets = [0, 20], sizes = [4, 512], strides = [1, 1]} : vector<4x1024xbf16> to vector<4x512xbf16>
    %10 = vector.extract_strided_slice %2 {offsets = [0, 21], sizes = [4, 512], strides = [1, 1]} : vector<4x1024xbf16> to vector<4x512xbf16>
    %11 = vector.extract_strided_slice %2 {offsets = [0, 22], sizes = [4, 512], strides = [1, 1]} : vector<4x1024xbf16> to vector<4x512xbf16>
    %12 = vector.extract_strided_slice %2 {offsets = [0, 100], sizes = [4, 512], strides = [1, 1]} : vector<4x1024xbf16> to vector<4x512xbf16>
    %13 = vector.extract_strided_slice %2 {offsets = [0, 101], sizes = [4, 512], strides = [1, 1]} : vector<4x1024xbf16> to vector<4x512xbf16>
    %14 = vector.extract_strided_slice %2 {offsets = [0, 102], sizes = [4, 512], strides = [1, 1]} : vector<4x1024xbf16> to vector<4x512xbf16>
    %15 = vector.extract_strided_slice %2 {offsets = [0, 110], sizes = [4, 512], strides = [1, 1]} : vector<4x1024xbf16> to vector<4x512xbf16>
    %16 = vector.extract_strided_slice %2 {offsets = [0, 111], sizes = [4, 512], strides = [1, 1]} : vector<4x1024xbf16> to vector<4x512xbf16>
    %17 = vector.extract_strided_slice %2 {offsets = [0, 112], sizes = [4, 512], strides = [1, 1]} : vector<4x1024xbf16> to vector<4x512xbf16>
    %18 = vector.extract_strided_slice %2 {offsets = [0, 120], sizes = [4, 512], strides = [1, 1]} : vector<4x1024xbf16> to vector<4x512xbf16>
    %19 = vector.extract_strided_slice %2 {offsets = [0, 121], sizes = [4, 512], strides = [1, 1]} : vector<4x1024xbf16> to vector<4x512xbf16>
    %20 = vector.extract_strided_slice %2 {offsets = [0, 122], sizes = [4, 512], strides = [1, 1]} : vector<4x1024xbf16> to vector<4x512xbf16>
    %21 = vector.extract_strided_slice %2 {offsets = [0, 200], sizes = [4, 512], strides = [1, 1]} : vector<4x1024xbf16> to vector<4x512xbf16>
    %22 = vector.extract_strided_slice %2 {offsets = [0, 201], sizes = [4, 512], strides = [1, 1]} : vector<4x1024xbf16> to vector<4x512xbf16>
    %23 = vector.extract_strided_slice %2 {offsets = [0, 202], sizes = [4, 512], strides = [1, 1]} : vector<4x1024xbf16> to vector<4x512xbf16>
    %24 = vector.extract_strided_slice %2 {offsets = [0, 210], sizes = [4, 512], strides = [1, 1]} : vector<4x1024xbf16> to vector<4x512xbf16>
    %25 = vector.extract_strided_slice %2 {offsets = [0, 211], sizes = [4, 512], strides = [1, 1]} : vector<4x1024xbf16> to vector<4x512xbf16>
    %26 = vector.extract_strided_slice %2 {offsets = [0, 212], sizes = [4, 512], strides = [1, 1]} : vector<4x1024xbf16> to vector<4x512xbf16>
    %27 = vector.extract_strided_slice %2 {offsets = [0, 220], sizes = [4, 512], strides = [1, 1]} : vector<4x1024xbf16> to vector<4x512xbf16>
    %28 = vector.extract_strided_slice %2 {offsets = [0, 221], sizes = [4, 512], strides = [1, 1]} : vector<4x1024xbf16> to vector<4x512xbf16>
    %29 = vector.extract_strided_slice %2 {offsets = [0, 222], sizes = [4, 512], strides = [1, 1]} : vector<4x1024xbf16> to vector<4x512xbf16>
    %30 = tpu.concatenate %3, %4, %5, %6, %7, %8, %9, %10, %11, %12, %13, %14, %15, %16, %17, %18 in 0 : vector<4x512xbf16>, vector<4x512xbf16>, vector<4x512xbf16>, vector<4x512xbf16>, vector<4x512xbf16>, vector<4x512xbf16>, vector<4x512xbf16>, vector<4x512xbf16>, vector<4x512xbf16>, vector<4x512xbf16>, vector<4x512xbf16>, vector<4x512xbf16>, vector<4x512xbf16>, vector<4x512xbf16>, vector<4x512xbf16>, vector<4x512xbf16> -> vector<64x512xbf16>
    %31 = tpu.concatenate %19, %20, %21, %22, %23, %24, %25, %26, %27, %28, %29 in 0 : vector<4x512xbf16>, vector<4x512xbf16>, vector<4x512xbf16>, vector<4x512xbf16>, vector<4x512xbf16>, vector<4x512xbf16>, vector<4x512xbf16>, vector<4x512xbf16>, vector<4x512xbf16>, vector<4x512xbf16>, vector<4x512xbf16> -> vector<44x512xbf16>
    %32 = tpu.concatenate %30, %31 in 0 : vector<64x512xbf16>, vector<44x512xbf16> -> vector<108x512xbf16>
    %c0_3 = arith.constant 0 : index
    %c0_4 = arith.constant 0 : index
    %33 = vector.load %arg3[%c0_3, %c0_4] : memref<8x108xbf16, #tpu.memory_space<vmem>>, vector<8x108xbf16>
    %cst = arith.constant dense<0.000000e+00> : vector<8x512xf32>
    %34 = tpu.matmul %33, %32, %cst {dimension_numbers = #tpu.dot_dimension_numbers<[1], [0], [0], [1], [0, 0, 1, 1], [], []>} : vector<8x108xbf16>, vector<108x512xbf16>, vector<8x512xf32> -> vector<8x512xf32>
    %35 = arith.truncf %34 : vector<8x512xf32> to vector<8x512xbf16>
    %c0_5 = arith.constant 0 : index
    %c0_6 = arith.constant 0 : index
    %36 = vector.load %arg5[%c0_5, %c0_6] : memref<8x512xbf16, #tpu.memory_space<vmem>>, vector<8x512xbf16>
    tpu.vector_store %arg5[%c0_5, %c0_6], %35 {strides = array<i32>} : memref<8x512xbf16, #tpu.memory_space<vmem>>, vector<8x512xbf16>,
    %c0_7 = arith.constant 0 : index
    %c0_8 = arith.constant 0 : index
    %37 = vector.load %arg4[%c0_7, %c0_8] : memref<1x512xf32, #tpu.memory_space<vmem>>, vector<1x512xf32>
    %38 = vector.broadcast %37 : vector<1x512xf32> to vector<8x512xf32>
    %39 = arith.mulf %34, %38 : vector<8x512xf32>
    %cst_9 = arith.constant dense<0.000000e+00> : vector<8xf32>
    %40 = vector.multi_reduction <add>, %39, %cst_9 [1] : vector<8x512xf32> to vector<8xf32>
    %41 = vector.shape_cast %40 : vector<8xf32> to vector<8x1xf32>
    %42 = arith.mulf %39, %34 : vector<8x512xf32>
    %cst_10 = arith.constant dense<0.000000e+00> : vector<8xf32>
    %43 = vector.multi_reduction <add>, %42, %cst_10 [1] : vector<8x512xf32> to vector<8xf32>
    %44 = vector.shape_cast %43 : vector<8xf32> to vector<8x1xf32>
    %45 = tpu.concatenate %41, %44 in 0 : vector<8x1xf32>, vector<8x1xf32> -> vector<16x1xf32>
    %46 = vector.shape_cast %45 : vector<16x1xf32> to vector<1x16x1xf32>
    %c0_11 = arith.constant 0 : index
    %c0_12 = arith.constant 0 : index
    %c0_13 = arith.constant 0 : index
    %47 = vector.load %arg6[%c0_11, %c0_12, %c0_13] : memref<1x16x1xf32, #tpu.memory_space<vmem>>, vector<1x16x1xf32>
    tpu.vector_store %arg6[%c0_11, %c0_12, %c0_13], %46 {strides = array<i32>} : memref<1x16x1xf32, #tpu.memory_space<vmem>>, vector<1x16x1xf32>,
    return
  }
  func.func @transform_0(%arg0: i32) -> (i32, i32) {
    %c0_i32 = arith.constant 0 : i32
    %c0_i32_0 = arith.constant 0 : i32
    return %c0_i32, %arg0 : i32, i32
  }
  func.func @transform_1(%arg0: i32) -> (i32, i32) {
    %c1_i32 = arith.constant 1 : i32
    %0 = arith.addi %arg0, %c1_i32 : i32
    %c0_i32 = arith.constant 0 : i32
    %c0_i32_0 = arith.constant 0 : i32
    return %c0_i32, %0 : i32, i32
  }
  func.func @transform_2(%arg0: i32) -> (i32, i32) {
    %c0_i32 = arith.constant 0 : i32
    %c0_i32_0 = arith.constant 0 : i32
    %c0_i32_1 = arith.constant 0 : i32
    return %c0_i32, %c0_i32_0 : i32, i32
  }
  func.func @transform_3(%arg0: i32) -> (i32, i32) {
    %c0_i32 = arith.constant 0 : i32
    %c0_i32_0 = arith.constant 0 : i32
    return %c0_i32, %arg0 : i32, i32
  }
  func.func @transform_4(%arg0: i32) -> (i32, i32) {
    %c0_i32 = arith.constant 0 : i32
    %c0_i32_0 = arith.constant 0 : i32
    return %c0_i32, %arg0 : i32, i32
  }
  func.func @transform_5(%arg0: i32) -> (i32, i32, i32) {
    %c0_i32 = arith.constant 0 : i32
    %c0_i32_0 = arith.constant 0 : i32
    %c0_i32_1 = arith.constant 0 : i32
    return %arg0, %c0_i32, %c0_i32_0 : i32, i32, i32
  }
}

module attributes {stable_mosaic.version = 11 : i64} {
  func.func @_bn_relu_kernel(%arg0: i32, %arg1: memref<8x2048xbf16, #tpu.memory_space<vmem>>, %arg2: memref<8x1xf32, #tpu.memory_space<vmem>>, %arg3: memref<8x1xf32, #tpu.memory_space<vmem>>, %arg4: memref<8x2048xbf16, #tpu.memory_space<vmem>>) attributes {dimension_semantics = [#tpu.dimension_semantics<parallel>], iteration_bounds = array<i64: 1>, scalar_prefetch = 0 : i64, scratch_operands = 0 : i64, tpu.core_type = #tpu.core_type<tc>, window_params = [{transform_indices = @transform_0, window_bounds = array<i64: 8, 2048>}, {pipeline_mode = #tpu.pipeline_mode<synchronous>, transform_indices = @transform_1, window_bounds = array<i64: 8, 1>}, {pipeline_mode = #tpu.pipeline_mode<synchronous>, transform_indices = @transform_2, window_bounds = array<i64: 8, 1>}, {transform_indices = @transform_3, window_bounds = array<i64: 8, 2048>}]} {
    %c0 = arith.constant 0 : index
    %c0_0 = arith.constant 0 : index
    %0 = vector.load %arg1[%c0, %c0_0] : memref<8x2048xbf16, #tpu.memory_space<vmem>>, vector<8x2048xbf16>
    %c0_1 = arith.constant 0 : index
    %c0_2 = arith.constant 0 : index
    %1 = vector.load %arg2[%c0_1, %c0_2] : memref<8x1xf32, #tpu.memory_space<vmem>>, vector<8x1xf32>
    %2 = arith.extf %0 : vector<8x2048xbf16> to vector<8x2048xf32>
    %3 = vector.broadcast %1 : vector<8x1xf32> to vector<8x2048xf32>
    %4 = arith.mulf %2, %3 : vector<8x2048xf32>
    %c0_3 = arith.constant 0 : index
    %c0_4 = arith.constant 0 : index
    %5 = vector.load %arg3[%c0_3, %c0_4] : memref<8x1xf32, #tpu.memory_space<vmem>>, vector<8x1xf32>
    %6 = vector.broadcast %5 : vector<8x1xf32> to vector<8x2048xf32>
    %7 = arith.addf %4, %6 : vector<8x2048xf32>
    %cst = arith.constant 0.000000e+00 : f32
    %8 = vector.broadcast %cst : f32 to vector<8x2048xf32>
    %9 = arith.maximumf %7, %8 : vector<8x2048xf32>
    %10 = arith.truncf %9 : vector<8x2048xf32> to vector<8x2048xbf16>
    %c0_5 = arith.constant 0 : index
    %c0_6 = arith.constant 0 : index
    %11 = vector.load %arg4[%c0_5, %c0_6] : memref<8x2048xbf16, #tpu.memory_space<vmem>>, vector<8x2048xbf16>
    tpu.vector_store %arg4[%c0_5, %c0_6], %10 {strides = array<i32>} : memref<8x2048xbf16, #tpu.memory_space<vmem>>, vector<8x2048xbf16>,
    return
  }
  func.func @transform_0(%arg0: i32) -> (i32, i32) {
    %c0_i32 = arith.constant 0 : i32
    %c0_i32_0 = arith.constant 0 : i32
    return %c0_i32, %arg0 : i32, i32
  }
  func.func @transform_1(%arg0: i32) -> (i32, i32) {
    %c0_i32 = arith.constant 0 : i32
    %c0_i32_0 = arith.constant 0 : i32
    %c0_i32_1 = arith.constant 0 : i32
    return %c0_i32, %c0_i32_0 : i32, i32
  }
  func.func @transform_2(%arg0: i32) -> (i32, i32) {
    %c0_i32 = arith.constant 0 : i32
    %c0_i32_0 = arith.constant 0 : i32
    %c0_i32_1 = arith.constant 0 : i32
    return %c0_i32, %c0_i32_0 : i32, i32
  }
  func.func @transform_3(%arg0: i32) -> (i32, i32) {
    %c0_i32 = arith.constant 0 : i32
    %c0_i32_0 = arith.constant 0 : i32
    return %c0_i32, %arg0 : i32, i32
  }
}

module attributes {stable_mosaic.version = 11 : i64} {
  func.func @kernel(%arg0: i32, %arg1: memref<8x512xbf16, #tpu.memory_space<vmem>>, %arg2: memref<8x512xbf16, #tpu.memory_space<vmem>>, %arg3: memref<8x216xbf16, #tpu.memory_space<vmem>>, %arg4: memref<1x512xf32, #tpu.memory_space<vmem>>, %arg5: memref<8x512xf32, #tpu.memory_space<vmem>>, %arg6: memref<1x16x1xf32, #tpu.memory_space<vmem>>) attributes {dimension_semantics = [#tpu.dimension_semantics<parallel>], iteration_bounds = array<i64: 4>, scalar_prefetch = 0 : i64, scratch_operands = 0 : i64, tpu.core_type = #tpu.core_type<tc>, window_params = [{transform_indices = @transform_0, window_bounds = array<i64: 8, 512>}, {transform_indices = @transform_1, window_bounds = array<i64: 8, 512>}, {pipeline_mode = #tpu.pipeline_mode<synchronous>, transform_indices = @transform_2, window_bounds = array<i64: 8, 216>}, {transform_indices = @transform_3, window_bounds = array<i64: 1, 512>}, {transform_indices = @transform_4, window_bounds = array<i64: 8, 512>}, {transform_indices = @transform_5, window_bounds = array<i64: 1, 16, 1>}]} {
    %c0 = arith.constant 0 : index
    %c0_0 = arith.constant 0 : index
    %0 = vector.load %arg1[%c0, %c0_0] : memref<8x512xbf16, #tpu.memory_space<vmem>>, vector<8x512xbf16>
    %c0_1 = arith.constant 0 : index
    %c0_2 = arith.constant 0 : index
    %1 = vector.load %arg2[%c0_1, %c0_2] : memref<8x512xbf16, #tpu.memory_space<vmem>>, vector<8x512xbf16>
    %2 = tpu.concatenate %0, %1 in 1 : vector<8x512xbf16>, vector<8x512xbf16> -> vector<8x1024xbf16>
    %3 = vector.extract_strided_slice %2 {offsets = [0, 0], sizes = [8, 512], strides = [1, 1]} : vector<8x1024xbf16> to vector<8x512xbf16>
    %4 = vector.extract_strided_slice %2 {offsets = [0, 1], sizes = [8, 512], strides = [1, 1]} : vector<8x1024xbf16> to vector<8x512xbf16>
    %5 = vector.extract_strided_slice %2 {offsets = [0, 2], sizes = [8, 512], strides = [1, 1]} : vector<8x1024xbf16> to vector<8x512xbf16>
    %6 = vector.extract_strided_slice %2 {offsets = [0, 10], sizes = [8, 512], strides = [1, 1]} : vector<8x1024xbf16> to vector<8x512xbf16>
    %7 = vector.extract_strided_slice %2 {offsets = [0, 11], sizes = [8, 512], strides = [1, 1]} : vector<8x1024xbf16> to vector<8x512xbf16>
    %8 = vector.extract_strided_slice %2 {offsets = [0, 12], sizes = [8, 512], strides = [1, 1]} : vector<8x1024xbf16> to vector<8x512xbf16>
    %9 = vector.extract_strided_slice %2 {offsets = [0, 20], sizes = [8, 512], strides = [1, 1]} : vector<8x1024xbf16> to vector<8x512xbf16>
    %10 = vector.extract_strided_slice %2 {offsets = [0, 21], sizes = [8, 512], strides = [1, 1]} : vector<8x1024xbf16> to vector<8x512xbf16>
    %11 = vector.extract_strided_slice %2 {offsets = [0, 22], sizes = [8, 512], strides = [1, 1]} : vector<8x1024xbf16> to vector<8x512xbf16>
    %12 = vector.extract_strided_slice %2 {offsets = [0, 100], sizes = [8, 512], strides = [1, 1]} : vector<8x1024xbf16> to vector<8x512xbf16>
    %13 = vector.extract_strided_slice %2 {offsets = [0, 101], sizes = [8, 512], strides = [1, 1]} : vector<8x1024xbf16> to vector<8x512xbf16>
    %14 = vector.extract_strided_slice %2 {offsets = [0, 102], sizes = [8, 512], strides = [1, 1]} : vector<8x1024xbf16> to vector<8x512xbf16>
    %15 = vector.extract_strided_slice %2 {offsets = [0, 110], sizes = [8, 512], strides = [1, 1]} : vector<8x1024xbf16> to vector<8x512xbf16>
    %16 = vector.extract_strided_slice %2 {offsets = [0, 111], sizes = [8, 512], strides = [1, 1]} : vector<8x1024xbf16> to vector<8x512xbf16>
    %17 = vector.extract_strided_slice %2 {offsets = [0, 112], sizes = [8, 512], strides = [1, 1]} : vector<8x1024xbf16> to vector<8x512xbf16>
    %18 = vector.extract_strided_slice %2 {offsets = [0, 120], sizes = [8, 512], strides = [1, 1]} : vector<8x1024xbf16> to vector<8x512xbf16>
    %19 = vector.extract_strided_slice %2 {offsets = [0, 121], sizes = [8, 512], strides = [1, 1]} : vector<8x1024xbf16> to vector<8x512xbf16>
    %20 = vector.extract_strided_slice %2 {offsets = [0, 122], sizes = [8, 512], strides = [1, 1]} : vector<8x1024xbf16> to vector<8x512xbf16>
    %21 = vector.extract_strided_slice %2 {offsets = [0, 200], sizes = [8, 512], strides = [1, 1]} : vector<8x1024xbf16> to vector<8x512xbf16>
    %22 = vector.extract_strided_slice %2 {offsets = [0, 201], sizes = [8, 512], strides = [1, 1]} : vector<8x1024xbf16> to vector<8x512xbf16>
    %23 = vector.extract_strided_slice %2 {offsets = [0, 202], sizes = [8, 512], strides = [1, 1]} : vector<8x1024xbf16> to vector<8x512xbf16>
    %24 = vector.extract_strided_slice %2 {offsets = [0, 210], sizes = [8, 512], strides = [1, 1]} : vector<8x1024xbf16> to vector<8x512xbf16>
    %25 = vector.extract_strided_slice %2 {offsets = [0, 211], sizes = [8, 512], strides = [1, 1]} : vector<8x1024xbf16> to vector<8x512xbf16>
    %26 = vector.extract_strided_slice %2 {offsets = [0, 212], sizes = [8, 512], strides = [1, 1]} : vector<8x1024xbf16> to vector<8x512xbf16>
    %27 = vector.extract_strided_slice %2 {offsets = [0, 220], sizes = [8, 512], strides = [1, 1]} : vector<8x1024xbf16> to vector<8x512xbf16>
    %28 = vector.extract_strided_slice %2 {offsets = [0, 221], sizes = [8, 512], strides = [1, 1]} : vector<8x1024xbf16> to vector<8x512xbf16>
    %29 = vector.extract_strided_slice %2 {offsets = [0, 222], sizes = [8, 512], strides = [1, 1]} : vector<8x1024xbf16> to vector<8x512xbf16>
    %30 = tpu.concatenate %3, %4, %5, %6, %7, %8, %9, %10, %11, %12, %13, %14, %15, %16, %17, %18 in 0 : vector<8x512xbf16>, vector<8x512xbf16>, vector<8x512xbf16>, vector<8x512xbf16>, vector<8x512xbf16>, vector<8x512xbf16>, vector<8x512xbf16>, vector<8x512xbf16>, vector<8x512xbf16>, vector<8x512xbf16>, vector<8x512xbf16>, vector<8x512xbf16>, vector<8x512xbf16>, vector<8x512xbf16>, vector<8x512xbf16>, vector<8x512xbf16> -> vector<128x512xbf16>
    %31 = tpu.concatenate %19, %20, %21, %22, %23, %24, %25, %26, %27, %28, %29 in 0 : vector<8x512xbf16>, vector<8x512xbf16>, vector<8x512xbf16>, vector<8x512xbf16>, vector<8x512xbf16>, vector<8x512xbf16>, vector<8x512xbf16>, vector<8x512xbf16>, vector<8x512xbf16>, vector<8x512xbf16>, vector<8x512xbf16> -> vector<88x512xbf16>
    %32 = tpu.concatenate %30, %31 in 0 : vector<128x512xbf16>, vector<88x512xbf16> -> vector<216x512xbf16>
    %c0_3 = arith.constant 0 : index
    %c0_4 = arith.constant 0 : index
    %33 = vector.load %arg3[%c0_3, %c0_4] : memref<8x216xbf16, #tpu.memory_space<vmem>>, vector<8x216xbf16>
    %cst = arith.constant dense<0.000000e+00> : vector<8x512xf32>
    %34 = tpu.matmul %33, %32, %cst {dimension_numbers = #tpu.dot_dimension_numbers<[1], [0], [0], [1], [0, 0, 1, 1], [], []>} : vector<8x216xbf16>, vector<216x512xbf16>, vector<8x512xf32> -> vector<8x512xf32>
    %c0_5 = arith.constant 0 : index
    %c0_6 = arith.constant 0 : index
    %35 = vector.load %arg5[%c0_5, %c0_6] : memref<8x512xf32, #tpu.memory_space<vmem>>, vector<8x512xf32>
    tpu.vector_store %arg5[%c0_5, %c0_6], %34 {strides = array<i32>} : memref<8x512xf32, #tpu.memory_space<vmem>>, vector<8x512xf32>,
    %c0_7 = arith.constant 0 : index
    %c0_8 = arith.constant 0 : index
    %36 = vector.load %arg4[%c0_7, %c0_8] : memref<1x512xf32, #tpu.memory_space<vmem>>, vector<1x512xf32>
    %37 = vector.broadcast %36 : vector<1x512xf32> to vector<8x512xf32>
    %38 = arith.mulf %34, %37 : vector<8x512xf32>
    %cst_9 = arith.constant dense<0.000000e+00> : vector<8xf32>
    %39 = vector.multi_reduction <add>, %38, %cst_9 [1] : vector<8x512xf32> to vector<8xf32>
    %40 = vector.shape_cast %39 : vector<8xf32> to vector<8x1xf32>
    %41 = arith.mulf %38, %34 : vector<8x512xf32>
    %cst_10 = arith.constant dense<0.000000e+00> : vector<8xf32>
    %42 = vector.multi_reduction <add>, %41, %cst_10 [1] : vector<8x512xf32> to vector<8xf32>
    %43 = vector.shape_cast %42 : vector<8xf32> to vector<8x1xf32>
    %44 = tpu.concatenate %40, %43 in 0 : vector<8x1xf32>, vector<8x1xf32> -> vector<16x1xf32>
    %45 = vector.shape_cast %44 : vector<16x1xf32> to vector<1x16x1xf32>
    %c0_11 = arith.constant 0 : index
    %c0_12 = arith.constant 0 : index
    %c0_13 = arith.constant 0 : index
    %46 = vector.load %arg6[%c0_11, %c0_12, %c0_13] : memref<1x16x1xf32, #tpu.memory_space<vmem>>, vector<1x16x1xf32>
    tpu.vector_store %arg6[%c0_11, %c0_12, %c0_13], %45 {strides = array<i32>} : memref<1x16x1xf32, #tpu.memory_space<vmem>>, vector<1x16x1xf32>,
    return
  }
  func.func @transform_0(%arg0: i32) -> (i32, i32) {
    %c0_i32 = arith.constant 0 : i32
    %c0_i32_0 = arith.constant 0 : i32
    return %c0_i32, %arg0 : i32, i32
  }
  func.func @transform_1(%arg0: i32) -> (i32, i32) {
    %c1_i32 = arith.constant 1 : i32
    %0 = arith.addi %arg0, %c1_i32 : i32
    %c0_i32 = arith.constant 0 : i32
    %c0_i32_0 = arith.constant 0 : i32
    return %c0_i32, %0 : i32, i32
  }
  func.func @transform_2(%arg0: i32) -> (i32, i32) {
    %c0_i32 = arith.constant 0 : i32
    %c0_i32_0 = arith.constant 0 : i32
    %c0_i32_1 = arith.constant 0 : i32
    return %c0_i32, %c0_i32_0 : i32, i32
  }
  func.func @transform_3(%arg0: i32) -> (i32, i32) {
    %c0_i32 = arith.constant 0 : i32
    %c0_i32_0 = arith.constant 0 : i32
    return %c0_i32, %arg0 : i32, i32
  }
  func.func @transform_4(%arg0: i32) -> (i32, i32) {
    %c0_i32 = arith.constant 0 : i32
    %c0_i32_0 = arith.constant 0 : i32
    return %c0_i32, %arg0 : i32, i32
  }
  func.func @transform_5(%arg0: i32) -> (i32, i32, i32) {
    %c0_i32 = arith.constant 0 : i32
    %c0_i32_0 = arith.constant 0 : i32
    %c0_i32_1 = arith.constant 0 : i32
    return %arg0, %c0_i32, %c0_i32_0 : i32, i32, i32
  }
}

module attributes {stable_mosaic.version = 11 : i64} {
  func.func @_bn_relu_kernel(%arg0: i32, %arg1: memref<8x2048xf32, #tpu.memory_space<vmem>>, %arg2: memref<8x1xf32, #tpu.memory_space<vmem>>, %arg3: memref<8x1xf32, #tpu.memory_space<vmem>>, %arg4: memref<8x2048xf32, #tpu.memory_space<vmem>>) attributes {dimension_semantics = [#tpu.dimension_semantics<parallel>], iteration_bounds = array<i64: 1>, scalar_prefetch = 0 : i64, scratch_operands = 0 : i64, tpu.core_type = #tpu.core_type<tc>, window_params = [{transform_indices = @transform_0, window_bounds = array<i64: 8, 2048>}, {pipeline_mode = #tpu.pipeline_mode<synchronous>, transform_indices = @transform_1, window_bounds = array<i64: 8, 1>}, {pipeline_mode = #tpu.pipeline_mode<synchronous>, transform_indices = @transform_2, window_bounds = array<i64: 8, 1>}, {transform_indices = @transform_3, window_bounds = array<i64: 8, 2048>}]} {
    %c0 = arith.constant 0 : index
    %c0_0 = arith.constant 0 : index
    %0 = vector.load %arg1[%c0, %c0_0] : memref<8x2048xf32, #tpu.memory_space<vmem>>, vector<8x2048xf32>
    %c0_1 = arith.constant 0 : index
    %c0_2 = arith.constant 0 : index
    %1 = vector.load %arg2[%c0_1, %c0_2] : memref<8x1xf32, #tpu.memory_space<vmem>>, vector<8x1xf32>
    %2 = vector.broadcast %1 : vector<8x1xf32> to vector<8x2048xf32>
    %3 = arith.mulf %0, %2 : vector<8x2048xf32>
    %c0_3 = arith.constant 0 : index
    %c0_4 = arith.constant 0 : index
    %4 = vector.load %arg3[%c0_3, %c0_4] : memref<8x1xf32, #tpu.memory_space<vmem>>, vector<8x1xf32>
    %5 = vector.broadcast %4 : vector<8x1xf32> to vector<8x2048xf32>
    %6 = arith.addf %3, %5 : vector<8x2048xf32>
    %cst = arith.constant 0.000000e+00 : f32
    %7 = vector.broadcast %cst : f32 to vector<8x2048xf32>
    %8 = arith.maximumf %6, %7 : vector<8x2048xf32>
    %c0_5 = arith.constant 0 : index
    %c0_6 = arith.constant 0 : index
    %9 = vector.load %arg4[%c0_5, %c0_6] : memref<8x2048xf32, #tpu.memory_space<vmem>>, vector<8x2048xf32>
    tpu.vector_store %arg4[%c0_5, %c0_6], %8 {strides = array<i32>} : memref<8x2048xf32, #tpu.memory_space<vmem>>, vector<8x2048xf32>,
    return
  }
  func.func @transform_0(%arg0: i32) -> (i32, i32) {
    %c0_i32 = arith.constant 0 : i32
    %c0_i32_0 = arith.constant 0 : i32
    return %c0_i32, %arg0 : i32, i32
  }
  func.func @transform_1(%arg0: i32) -> (i32, i32) {
    %c0_i32 = arith.constant 0 : i32
    %c0_i32_0 = arith.constant 0 : i32
    %c0_i32_1 = arith.constant 0 : i32
    return %c0_i32, %c0_i32_0 : i32, i32
  }
  func.func @transform_2(%arg0: i32) -> (i32, i32) {
    %c0_i32 = arith.constant 0 : i32
    %c0_i32_0 = arith.constant 0 : i32
    %c0_i32_1 = arith.constant 0 : i32
    return %c0_i32, %c0_i32_0 : i32, i32
  }
  func.func @transform_3(%arg0: i32) -> (i32, i32) {
    %c0_i32 = arith.constant 0 : i32
    %c0_i32_0 = arith.constant 0 : i32
    return %c0_i32, %arg0 : i32, i32
  }
}

</mosaic_0001>

<llo_original>
// kernel: double_conv3d.5
$region0: #{double_conv3d.5}
  #allocation0 [shape = 'u32[]', space=smem, size = 0x4, offset = 0x4, fixed_abs, tag = 'smem constant byte address 0x4 - core index']
  #allocation1 [shape = 'u32[72,128]{1,0:T(1,128)}', space=vmem, size = 0x9000, scoped, tag = 'internal scratch']
  %s0 = inlined_call_operand.vmem [shape: bf16[8,2048], index: 0, kind: input, shape index: {}]
  %s1 = inlined_call_operand.vmem [shape: f32[8,1], index: 1, kind: input, shape index: {}]
  %s2 = inlined_call_operand.vmem [shape: f32[8,1], index: 2, kind: input, shape index: {}]
  %s3 = inlined_call_operand.vmem [shape: bf16[8,2048], index: 3, kind: output, shape index: {}]
  %s4 = sld [smem:[#allocation0]]
  $region22: #{double_conv3d.5} parent=0
    _
  %s6 = ssub.s32 1, %s4
  %s7 = scalar_select 0, %s6, %s4
  // Predicated region
  $region2: #{double_conv3d.5} parent=0 // pred_check
    _
  $region3: #{double_conv3d.5} parent=0 // pred_check_branch
    %9 = sbr.rel (0) target = $region5
  $region4: #{double_conv3d.5} parent=0 // pred_region
    _
  $region5: #{double_conv3d.5} parent=0 // pred_fallthru
    _
  // Predicated region
  $region6: #{double_conv3d.5} parent=0 // pred_check
    _
  $region7: #{double_conv3d.5} parent=0 // pred_check_branch
    %11 = sbr.rel (0) target = $region9
  $region8: #{double_conv3d.5} parent=0 // pred_region
    _
  $region9: #{double_conv3d.5} parent=0 // pred_fallthru
    _
  // Predicated region
  $region10: #{double_conv3d.5} parent=0 // pred_check
    _
  $region11: #{double_conv3d.5} parent=0 // pred_check_branch
    %13 = sbr.rel (0) target = $region13
  $region12: #{double_conv3d.5} parent=0 // pred_region
    _
  $region13: #{double_conv3d.5} parent=0 // pred_fallthru
    _
  %v14 = vld [vmem:[%s0] sm:$0xff]
  %v15 = vld [vmem:[%s0 + $0x8] sm:$0xff]
  %v16 = vld [vmem:[%s0 + $0x10] sm:$0xff]
  %v17 = vld [vmem:[%s0 + $0x18] sm:$0xff]
  %v18 = vld [vmem:[%s0 + $0x20] sm:$0xff]
  %v19 = vld [vmem:[%s0 + $0x28] sm:$0xff]
  %v20 = vld [vmem:[%s0 + $0x30] sm:$0xff]
  %v21 = vld [vmem:[%s0 + $0x38] sm:$0xff]
  %v22 = vld [vmem:[%s1] sm:$0xff]
  %v23 = vunpack.c.l.bf16 %v14
  %v24 = vunpack.c.h.bf16 %v14
  %v25 = vunpack.c.l.bf16 %v15
  %v26 = vunpack.c.h.bf16 %v15
  %v27 = vunpack.c.l.bf16 %v16
  %v28 = vunpack.c.h.bf16 %v16
  %v29 = vunpack.c.l.bf16 %v17
  %v30 = vunpack.c.h.bf16 %v17
  %v31 = vunpack.c.l.bf16 %v18
  %v32 = vunpack.c.h.bf16 %v18
  %v33 = vunpack.c.l.bf16 %v19
  %v34 = vunpack.c.h.bf16 %v19
  %v35 = vunpack.c.l.bf16 %v20
  %v36 = vunpack.c.h.bf16 %v20
  %v37 = vunpack.c.l.bf16 %v21
  %v38 = vunpack.c.h.bf16 %v21
  %40 = vset.pattern.permute.xlu0 0
  %41 = vperm.xlu0 %40, %v22
  %v42 = vpop.permute.xlu0 %41
  %v44 = vmul.f32 %v23, %v42
  %v45 = vmul.f32 %v24, %v42
  %v46 = vmul.f32 %v25, %v42
  %v47 = vmul.f32 %v26, %v42
  %v48 = vmul.f32 %v27, %v42
  %v49 = vmul.f32 %v28, %v42
  %v50 = vmul.f32 %v29, %v42
  %v51 = vmul.f32 %v30, %v42
  %v52 = vmul.f32 %v31, %v42
  %v53 = vmul.f32 %v32, %v42
  %v54 = vmul.f32 %v33, %v42
  %v55 = vmul.f32 %v34, %v42
  %v56 = vmul.f32 %v35, %v42
  %v57 = vmul.f32 %v36, %v42
  %v58 = vmul.f32 %v37, %v42
  %v59 = vmul.f32 %v38, %v42
  %v60 = vld [vmem:[%s2] sm:$0xff]
  %62 = vset.pattern.permute.xlu0 0
  %63 = vperm.xlu0 %62, %v60
  %v64 = vpop.permute.xlu0 %63
  %v66 = vadd.f32 %v44, %v64
  %v67 = vadd.f32 %v45, %v64
  %v68 = vadd.f32 %v46, %v64
  %v69 = vadd.f32 %v47, %v64
  %v70 = vadd.f32 %v48, %v64
  %v71 = vadd.f32 %v49, %v64
  %v72 = vadd.f32 %v50, %v64
  %v73 = vadd.f32 %v51, %v64
  %v74 = vadd.f32 %v52, %v64
  %v75 = vadd.f32 %v53, %v64
  %v76 = vadd.f32 %v54, %v64
  %v77 = vadd.f32 %v55, %v64
  %v78 = vadd.f32 %v56, %v64
  %v79 = vadd.f32 %v57, %v64
  %v80 = vadd.f32 %v58, %v64
  %v81 = vadd.f32 %v59, %v64
  %v82 = vmax.f32 %v66, 0.0
  %v83 = vmax.f32 %v67, 0.0
  %v84 = vmax.f32 %v68, 0.0
  %v85 = vmax.f32 %v69, 0.0
  %v86 = vmax.f32 %v70, 0.0
  %v87 = vmax.f32 %v71, 0.0
  %v88 = vmax.f32 %v72, 0.0
  %v89 = vmax.f32 %v73, 0.0
  %v90 = vmax.f32 %v74, 0.0
  %v91 = vmax.f32 %v75, 0.0
  %v92 = vmax.f32 %v76, 0.0
  %v93 = vmax.f32 %v77, 0.0
  %v94 = vmax.f32 %v78, 0.0
  %v95 = vmax.f32 %v79, 0.0
  %v96 = vmax.f32 %v80, 0.0
  %v97 = vmax.f32 %v81, 0.0
  %v98 = vpack.c.bf16 %v83, %v82
  %v99 = vpack.c.bf16 %v85, %v84
  %v100 = vpack.c.bf16 %v87, %v86
  %v101 = vpack.c.bf16 %v89, %v88
  %v102 = vpack.c.bf16 %v91, %v90
  %v103 = vpack.c.bf16 %v93, %v92
  %v104 = vpack.c.bf16 %v95, %v94
  %v105 = vpack.c.bf16 %v97, %v96
  %106 = vst [vmem:[%s3] sm:$0xff] %v98
  %107 = vst [vmem:[%s3 + $0x8] sm:$0xff] %v99
  %108 = vst [vmem:[%s3 + $0x10] sm:$0xff] %v100
  %109 = vst [vmem:[%s3 + $0x18] sm:$0xff] %v101
  %110 = vst [vmem:[%s3 + $0x20] sm:$0xff] %v102
  %111 = vst [vmem:[%s3 + $0x28] sm:$0xff] %v103
  %112 = vst [vmem:[%s3 + $0x30] sm:$0xff] %v104
  %113 = vst [vmem:[%s3 + $0x38] sm:$0xff] %v105
  // Predicated region
  $region14: #{double_conv3d.5} parent=0 // pred_check
    _
  $region15: #{double_conv3d.5} parent=0 // pred_check_branch
    %115 = sbr.rel (0) target = $region17
  $region16: #{double_conv3d.5} parent=0 // pred_region
    _
  $region17: #{double_conv3d.5} parent=0 // pred_fallthru
    _
  // Predicated region
  $region18: #{double_conv3d.5} parent=0 // pred_check
    _
  $region19: #{double_conv3d.5} parent=0 // pred_check_branch
    %117 = sbr.rel (0) target = $region21
  $region20: #{double_conv3d.5} parent=0 // pred_region
    _
  $region21: #{double_conv3d.5} parent=0 // pred_fallthru
    _

// kernel: double_conv3d.4
$region0: #{double_conv3d.4}
  #allocation0 [shape = 'u32[]', space=smem, size = 0x4, offset = 0x4, fixed_abs, tag = 'smem constant byte address 0x4 - core index']
  #allocation1 [shape = 'u32[72,128]{1,0:T(1,128)}', space=vmem, size = 0x9000, scoped, tag = 'internal scratch']
  %s0 = inlined_call_operand.vmem [shape: bf16[4,2560], index: 0, kind: input, shape index: {}, may-alias: {0,1}]
  %s1 = inlined_call_operand.vmem [shape: bf16[4,2560], index: 1, kind: input, shape index: {}, may-alias: {0,1}]
  %s2 = inlined_call_operand.vmem [shape: bf16[8,108], index: 2, kind: input, shape index: {}]
  %s3 = inlined_call_operand.vmem [shape: f32[1,2048], index: 3, kind: input, shape index: {}]
  %s4 = inlined_call_operand.vmem [shape: bf16[8,2048], index: 4, kind: output, shape index: {0}]
  %s5 = inlined_call_operand.vmem [shape: f32[4,16,1], index: 5, kind: output, shape index: {1}]
  %6 = xla_tuple %s4, %s5
  %s7 = sld [smem:[#allocation0]]
  $region57: #{double_conv3d.4} parent=0
    _
  %s9 = ssub.s32 1, %s7
  %s10 = scalar_select 0, %s9, %s7
  loop: start=0, step=1, limit=6
  $region2: #{double_conv3d.4} parent=0 // loop_pre_header
    _
  $region3: #{double_conv3d.4} parent=0 // loop_header
    %s12 = sphi 0, %s16
    %p13 = scmp.ge.s32.totalorder %s12, 6
    %s22 = sphi 0, %s24
    %s25 = sphi 0, %s22
    %s26 = sphi 0, %s25
    %s42 = sphi 0, %s26
    %s50 = sphi 0, %s52
    %s53 = sphi 0, %s50
    %s54 = sphi 0, %s53
    %s70 = sphi 0, %s54
    %s74 = sphi 0, %s74
    %s76 = sphi 0, %s74
    %s77 = sphi 0, %s76
    %s91 = sphi 0, %s77
    %s97 = sphi 0, %s99
    %s100 = sphi 0, %s97
    %s101 = sphi 0, %s100
    %s117 = sphi 0, %s101
    %s123 = sphi 0, %s125
    %s126 = sphi 0, %s123
    %s127 = sphi 0, %s126
    %s143 = sphi 0, %s127
    %s149 = sphi 0, %s151
    %s152 = sphi 0, %s149
    %s153 = sphi 0, %s152
    %s169 = sphi 0, %s153
  $region4: #{double_conv3d.4} parent=0 // loop_header_branch
    %15 = sbr.rel (%p13) target = $region8
  $region5: #{double_conv3d.4} parent=0 // loop_body
    %s17 = ssub.s32 %s12, 1
    %s18 = ssub.s32 %s12, 2
    %s19 = sadd.s32 %s12, 1
    %s20 = ssub.s32 %s12, %s19
    %p21 = scmp.eq.s32.totalorder %s20, 0
    %s23 = sadd.s32 %s22, 1
    %s24 = scalar_select %p21, %s22, %s23
    %p27 = pneg %p21
    %p28 = scmp.eq.s32.totalorder %s12, 3
    %p29 = por %p27, %p28
    %p30 = scmp.ne.s32.totalorder %s22, %s25
    %p31 = scmp.eq.s32.totalorder %s12, 0
    %p32 = por %p30, %p31
    %p33 = scmp.ne.s32.totalorder %s22, %s25
    %p34 = scmp.eq.s32.totalorder %s17, 3
    %p35 = por %p33, %p34
    %p36 = scmp.ne.s32.totalorder %s25, %s26
    %p37 = scmp.eq.s32.totalorder %s17, 0
    %p38 = por %p36, %p37
    %p39 = scmp.ne.s32.totalorder %s25, %s26
    %p40 = scmp.eq.s32.totalorder %s18, 3
    %p41 = por %p39, %p40
    %p43 = scmp.ne.s32.totalorder %s26, %s42
    %p44 = scmp.eq.s32.totalorder %s18, 0
    %p45 = por %p43, %p44
    %s46 = sadd.s32 %s12, 1
    %s47 = sadd.s32 %s19, 1
    %s48 = ssub.s32 %s46, %s47
    %p49 = scmp.eq.s32.totalorder %s48, 0
    %s51 = sadd.s32 %s50, 1
    %s52 = scalar_select %p49, %s50, %s51
    %p55 = pneg %p49
    %p56 = scmp.eq.s32.totalorder %s12, 3
    %p57 = por %p55, %p56
    %p58 = scmp.ne.s32.totalorder %s50, %s53
    %p59 = scmp.eq.s32.totalorder %s12, 0
    %p60 = por %p58, %p59
    %p61 = scmp.ne.s32.totalorder %s50, %s53
    %p62 = scmp.eq.s32.totalorder %s17, 3
    %p63 = por %p61, %p62
    %p64 = scmp.ne.s32.totalorder %s53, %s54
    %p65 = scmp.eq.s32.totalorder %s17, 0
    %p66 = por %p64, %p65
    %p67 = scmp.ne.s32.totalorder %s53, %s54
    %p68 = scmp.eq.s32.totalorder %s18, 3
    %p69 = por %p67, %p68
    %p71 = scmp.ne.s32.totalorder %s54, %s70
    %p72 = scmp.eq.s32.totalorder %s18, 0
    %p73 = por %p71, %p72
    %s75 = sadd.s32 %s74, 1
    %p78 = scmp.eq.s32.totalorder %s12, 3
    %p79 = scmp.ne.s32.totalorder %s74, %s76
    %p80 = scmp.eq.s32.totalorder %s12, 0
    %p81 = por %p79, %p80
    %p82 = scmp.ne.s32.totalorder %s74, %s76
    %p83 = scmp.eq.s32.totalorder %s17, 3
    %p84 = por %p82, %p83
    %p85 = scmp.ne.s32.totalorder %s76, %s77
    %p86 = scmp.eq.s32.totalorder %s17, 0
    %p87 = por %p85, %p86
    %p88 = scmp.ne.s32.totalorder %s76, %s77
    %p89 = scmp.eq.s32.totalorder %s18, 3
    %p90 = por %p88, %p89
    %p92 = scmp.ne.s32.totalorder %s77, %s91
    %p93 = scmp.eq.s32.totalorder %s18, 0
    %p94 = por %p92, %p93
    %s95 = ssub.s32 %s12, %s19
    %p96 = scmp.eq.s32.totalorder %s95, 0
    %s98 = sadd.s32 %s97, 1
    %s99 = scalar_select %p96, %s97, %s98
    %p102 = pneg %p96
    %p103 = scmp.eq.s32.totalorder %s12, 3
    %p104 = por %p102, %p103
    %p105 = scmp.ne.s32.totalorder %s97, %s100
    %p106 = scmp.eq.s32.totalorder %s12, 0
    %p107 = por %p105, %p106
    %p108 = scmp.ne.s32.totalorder %s97, %s100
    %p109 = scmp.eq.s32.totalorder %s17, 3
    %p110 = por %p108, %p109
    %p111 = scmp.ne.s32.totalorder %s100, %s101
    %p112 = scmp.eq.s32.totalorder %s17, 0
    %p113 = por %p111, %p112
    %p114 = scmp.ne.s32.totalorder %s100, %s101
    %p115 = scmp.eq.s32.totalorder %s18, 3
    %p116 = por %p114, %p115
    %p118 = scmp.ne.s32.totalorder %s101, %s117
    %p119 = scmp.eq.s32.totalorder %s18, 0
    %p120 = por %p118, %p119
    %s121 = ssub.s32 %s12, %s19
    %p122 = scmp.eq.s32.totalorder %s121, 0
    %s124 = sadd.s32 %s123, 1
    %s125 = scalar_select %p122, %s123, %s124
    %p128 = pneg %p122
    %p129 = scmp.eq.s32.totalorder %s12, 3
    %p130 = por %p128, %p129
    %p131 = scmp.ne.s32.totalorder %s123, %s126
    %p132 = scmp.eq.s32.totalorder %s12, 0
    %p133 = por %p131, %p132
    %p134 = scmp.ne.s32.totalorder %s123, %s126
    %p135 = scmp.eq.s32.totalorder %s17, 3
    %p136 = por %p134, %p135
    %p137 = scmp.ne.s32.totalorder %s126, %s127
    %p138 = scmp.eq.s32.totalorder %s17, 0
    %p139 = por %p137, %p138
    %p140 = scmp.ne.s32.totalorder %s126, %s127
    %p141 = scmp.eq.s32.totalorder %s18, 3
    %p142 = por %p140, %p141
    %p144 = scmp.ne.s32.totalorder %s127, %s143
    %p145 = scmp.eq.s32.totalorder %s18, 0
    %p146 = por %p144, %p145
    %s147 = ssub.s32 %s12, %s19
    %p148 = scmp.eq.s32.totalorder %s147, 0
    %s150 = sadd.s32 %s149, 1
    %s151 = scalar_select %p148, %s149, %s150
    %p154 = pneg %p148
    %p155 = scmp.eq.s32.totalorder %s12, 3
    %p156 = por %p154, %p155
    %p157 = scmp.ne.s32.totalorder %s149, %s152
    %p158 = scmp.eq.s32.totalorder %s12, 0
    %p159 = por %p157, %p158
    %p160 = scmp.ne.s32.totalorder %s149, %s152
    %p161 = scmp.eq.s32.totalorder %s17, 3
    %p162 = por %p160, %p161
    %p163 = scmp.ne.s32.totalorder %s152, %s153
    %p164 = scmp.eq.s32.totalorder %s17, 0
    %p165 = por %p163, %p164
    %p166 = scmp.ne.s32.totalorder %s152, %s153
    %p167 = scmp.eq.s32.totalorder %s18, 3
    %p168 = por %p166, %p167
    %p170 = scmp.ne.s32.totalorder %s153, %s169
    %p171 = scmp.eq.s32.totalorder %s18, 0
    %p172 = por %p170, %p171
    %p173 = scmp.le.s32.totalorder 1, %s12
    %p174 = scmp.lt.s32.totalorder %s12, 5
    %p175 = pnand %p173, %p174
    %p176 = pneg %p175
    // Predicated region
    $region9: #{double_conv3d.4} parent=5 // pred_check
      _
    $region10: #{double_conv3d.4} parent=5 // pred_check_branch
      %178 = sbr.rel (%p175) target = $region12
    $region11: #{double_conv3d.4} parent=5 // pred_region
      %s179 = ssub.s32 %s12, 1
      // Predicated region
      $region13: #{double_conv3d.4} parent=11 // pred_check
        %p180 = pneg %p87
      $region14: #{double_conv3d.4} parent=11 // pred_check_branch
        %182 = sbr.rel (%p180) target = $region16
      $region15: #{double_conv3d.4} parent=11 // pred_region
        _
      $region16: #{double_conv3d.4} parent=11 // pred_fallthru
        _
    $region12: #{double_conv3d.4} parent=5 // pred_fallthru
      _
    %p183 = scmp.lt.s32.totalorder %s12, 4
    // Predicated region
    $region17: #{double_conv3d.4} parent=5 // pred_check
      %p184 = pneg %p183
    $region18: #{double_conv3d.4} parent=5 // pred_check_branch
      %186 = sbr.rel (%p184) target = $region20
    $region19: #{double_conv3d.4} parent=5 // pred_region
      // Predicated region
      $region21: #{double_conv3d.4} parent=19 // pred_check
        %p187 = pneg %p32
      $region22: #{double_conv3d.4} parent=19 // pred_check_branch
        %189 = sbr.rel (%p187) target = $region24
      $region23: #{double_conv3d.4} parent=19 // pred_region
        %s190 = smul.u32 4, %s12
        %p191 = scmp.lt.s32.totalorder %s190, 19
        %s192 = scalar_select %p191, %s190, 19
        %s193 = smul.addr %s192, 2
        %s194 = scalar_lea.vmem %s0, %s193
        %s195 = smul.u32 4, %s12
      $region24: #{double_conv3d.4} parent=19 // pred_fallthru
        _
      // Predicated region
      $region25: #{double_conv3d.4} parent=19 // pred_check
        %p196 = pneg %p60
      $region26: #{double_conv3d.4} parent=19 // pred_check_branch
        %198 = sbr.rel (%p196) target = $region28
      $region27: #{double_conv3d.4} parent=19 // pred_region
        %s199 = sadd.s32 %s12, 1
        %s200 = smul.u32 4, %s199
        %p201 = scmp.lt.s32.totalorder %s200, 19
        %s202 = scalar_select %p201, %s200, 19
        %s203 = smul.addr %s202, 2
        %s204 = scalar_lea.vmem %s1, %s203
        %s205 = sadd.s32 %s12, 1
        %s206 = smul.u32 4, %s205
      $region28: #{double_conv3d.4} parent=19 // pred_fallthru
        _
      // Predicated region
      $region29: #{double_conv3d.4} parent=19 // pred_check
        %p207 = pneg %p107
      $region30: #{double_conv3d.4} parent=19 // pred_check_branch
        %209 = sbr.rel (%p207) target = $region32
      $region31: #{double_conv3d.4} parent=19 // pred_region
        %s210 = smul.u32 4, %s12
        %p211 = scmp.lt.s32.totalorder %s210, 15
        %s212 = scalar_select %p211, %s210, 15
        %s213 = scalar_lea.vmem %s3, %s212
        %s214 = smul.u32 4, %s12
      $region32: #{double_conv3d.4} parent=19 // pred_fallthru
        _
    $region20: #{double_conv3d.4} parent=5 // pred_fallthru
      _
    %p215 = scmp.le.s32.totalorder 1, %s12
    %p216 = scmp.lt.s32.totalorder %s12, 5
    %p217 = pnand %p215, %p216
    %p218 = pneg %p217
    // Predicated region
    $region33: #{double_conv3d.4} parent=5 // pred_check
      _
    $region34: #{double_conv3d.4} parent=5 // pred_check_branch
      %220 = sbr.rel (%p217) target = $region36
    $region35: #{double_conv3d.4} parent=5 // pred_region
      %s221 = ssub.s32 %s12, 1
      %s222 = smul.u32 4, %s17
      %p223 = scmp.lt.s32.totalorder %s222, 19
      %s224 = scalar_select %p223, %s222, 19
      %s225 = smul.addr %s224, 2
      %s226 = scalar_lea.vmem %s0, %s225
      %p227 = pneg %p38
      %p228 = pneg %p35
      %s229 = sadd.s32 %s17, 1
      %s230 = smul.u32 4, %s229
      %p231 = scmp.lt.s32.totalorder %s230, 19
      %s232 = scalar_select %p231, %s230, 19
      %s233 = smul.addr %s232, 2
      %s234 = scalar_lea.vmem %s1, %s233
      %p235 = pneg %p66
      %p236 = pneg %p63
      %p237 = pneg %p87
      %p238 = pneg %p84
      %s239 = smul.u32 4, %s17
      %p240 = scmp.lt.s32.totalorder %s239, 15
      %s241 = scalar_select %p240, %s239, 15
      %s242 = scalar_lea.vmem %s3, %s241
      %p243 = pneg %p113
      %p244 = pneg %p110
      %p245 = pneg %p139
      %p246 = pneg %p136
      %s247 = smul.u32 4, %s17
      %p248 = scmp.lt.s32.totalorder %s247, 15
      %s249 = scalar_select %p248, %s247, 15
      %s250 = smul.addr %s249, 4
      %s251 = scalar_lea.vmem %s4, %s250
      %p252 = pneg %p165
      %p253 = pneg %p162
      %p254 = scmp.lt.s32.totalorder %s17, 3
      %s255 = scalar_select %p254, %s17, 3
      %s256 = smul.addr %s255, 2
      %s257 = smul.addr %s256, 8
      %s258 = scalar_lea.vmem %s5, %s257
      %s259 = smul.u32 4, %s17
      %p260 = scmp.lt.s32.totalorder %s259, 19
      %s261 = scalar_select %p260, %s259, 19
      %s262 = smul.addr %s261, 2
      %s263 = scalar_lea.vmem %s0, %s262
      %s264 = smul.u32 4, %s17
      %s265 = sadd.s32 %s17, 1
      %s266 = smul.u32 4, %s265
      %p267 = scmp.lt.s32.totalorder %s266, 19
      %s268 = scalar_select %p267, %s266, 19
      %s269 = smul.addr %s268, 2
      %s270 = scalar_lea.vmem %s1, %s269
      %s271 = sadd.s32 %s17, 1
      %s272 = smul.u32 4, %s271
      %s273 = smul.u32 4, %s17
      %p274 = scmp.lt.s32.totalorder %s273, 15
      %s275 = scalar_select %p274, %s273, 15
      %s276 = scalar_lea.vmem %s3, %s275
      %s277 = smul.u32 4, %s17
      %s278 = smul.u32 4, %s17
      %p279 = scmp.lt.s32.totalorder %s278, 15
      %s280 = scalar_select %p279, %s278, 15
      %s281 = smul.addr %s280, 4
      %s282 = scalar_lea.vmem %s4, %s281
      %s283 = smul.u32 4, %s17
      %p284 = scmp.lt.s32.totalorder %s17, 3
      %s285 = scalar_select %p284, %s17, 3
      %s286 = smul.addr %s285, 2
      %s287 = smul.addr %s286, 8
      %s288 = scalar_lea.vmem %s5, %s287
      %v290 = vld [vmem:[%s263] sm:$0xff]
      %v291 = vld [vmem:[%s270] sm:$0xff]
      %293 = vst [vmem:[#allocation1] ss:$4 sm:$0xff] %v290
      %v294 = vld.sshfl [vmem:[#allocation1] sm:$0xff pattern:$0x73625140]
      %v296 = vld.sshfl [vmem:[#allocation1 + $0x8] sm:$0xff pattern:$0x73625140]
      %v298 = vld.sshfl [vmem:[#allocation1 + $0x10] sm:$0xff pattern:$0x73625140]
      %v300 = vld.sshfl [vmem:[#allocation1 + $0x18] sm:$0xff pattern:$0x73625140]
      %303 = vst [vmem:[#allocation1] ss:$4 sm:$0xff] %v291
      %v304 = vld.sshfl [vmem:[#allocation1] sm:$0xff pattern:$0x73625140]
      %v306 = vld.sshfl [vmem:[#allocation1 + $0x8] sm:$0xff pattern:$0x73625140]
      %v308 = vrot.slane %v294, 6
      %v309 = vrot.slane %v296, 6
      %v310 = vrot.slane %v298, 6
      %v311 = vrot.slane %v300, 6
      %v312 = vrot.slane %v304, 6
      %313 = vrot.lane.b32.xlu0 %v308, 127
      %v314 = vpop.permute.xlu0 %313
      %315 = vrot.lane.b32.xlu0 %v309, 127
      %v316 = vpop.permute.xlu0 %315
      %317 = vrot.lane.b32.xlu0 %v310, 127
      %v318 = vpop.permute.xlu0 %317
      %319 = vrot.lane.b32.xlu0 %v311, 127
      %v320 = vpop.permute.xlu0 %319
      %321 = vrot.lane.b32.xlu0 %v312, 127
      %v322 = vpop.permute.xlu0 %321
      %vm323 = vcmask 1039360
      %v324 = vsel %vm323, %v314, %v316
      %v325 = vsel %vm323, %v316, %v318
      %v326 = vsel %vm323, %v318, %v320
      %v327 = vsel %vm323, %v320, %v322
      %v328 = vrot.slane %v294, 4
      %v329 = vrot.slane %v296, 4
      %v330 = vrot.slane %v298, 4
      %v331 = vrot.slane %v300, 4
      %v332 = vrot.slane %v304, 4
      %333 = vrot.lane.b32.xlu0 %v328, 126
      %v334 = vpop.permute.xlu0 %333
      %335 = vrot.lane.b32.xlu0 %v329, 126
      %v336 = vpop.permute.xlu0 %335
      %337 = vrot.lane.b32.xlu0 %v330, 126
      %v338 = vpop.permute.xlu0 %337
      %339 = vrot.lane.b32.xlu0 %v331, 126
      %v340 = vpop.permute.xlu0 %339
      %341 = vrot.lane.b32.xlu0 %v332, 126
      %v342 = vpop.permute.xlu0 %341
      %vm343 = vcmask 1031168
      %v344 = vsel %vm343, %v334, %v336
      %v345 = vsel %vm343, %v336, %v338
      %v346 = vsel %vm343, %v338, %v340
      %v347 = vsel %vm343, %v340, %v342
      %v348 = vrot.slane %v294, 2
      %v349 = vrot.slane %v296, 2
      %v350 = vrot.slane %v298, 2
      %v351 = vrot.slane %v300, 2
      %v352 = vrot.slane %v304, 2
      %353 = vrot.lane.b32.xlu0 %v348, 118
      %v354 = vpop.permute.xlu0 %353
      %355 = vrot.lane.b32.xlu0 %v349, 118
      %v356 = vpop.permute.xlu0 %355
      %357 = vrot.lane.b32.xlu0 %v350, 118
      %v358 = vpop.permute.xlu0 %357
      %359 = vrot.lane.b32.xlu0 %v351, 118
      %v360 = vpop.permute.xlu0 %359
      %361 = vrot.lane.b32.xlu0 %v352, 118
      %v362 = vpop.permute.xlu0 %361
      %vm363 = vcmask 965632
      %v364 = vsel %vm363, %v354, %v356
      %v365 = vsel %vm363, %v356, %v358
      %v366 = vsel %vm363, %v358, %v360
      %v367 = vsel %vm363, %v360, %v362
      %368 = vrot.lane.b32.xlu0 %v294, 117
      %v369 = vpop.permute.xlu0 %368
      %370 = vrot.lane.b32.xlu0 %v296, 117
      %v371 = vpop.permute.xlu0 %370
      %372 = vrot.lane.b32.xlu0 %v298, 117
      %v373 = vpop.permute.xlu0 %372
      %374 = vrot.lane.b32.xlu0 %v300, 117
      %v375 = vpop.permute.xlu0 %374
      %376 = vrot.lane.b32.xlu0 %v304, 117
      %v377 = vpop.permute.xlu0 %376
      %vm378 = vcmask 957440
      %v379 = vsel %vm378, %v369, %v371
      %v380 = vsel %vm378, %v371, %v373
      %v381 = vsel %vm378, %v373, %v375
      %v382 = vsel %vm378, %v375, %v377
      %383 = vrot.lane.b32.xlu0 %v308, 116
      %v384 = vpop.permute.xlu0 %383
      %385 = vrot.lane.b32.xlu0 %v309, 116
      %v386 = vpop.permute.xlu0 %385
      %387 = vrot.lane.b32.xlu0 %v310, 116
      %v388 = vpop.permute.xlu0 %387
      %389 = vrot.lane.b32.xlu0 %v311, 116
      %v390 = vpop.permute.xlu0 %389
      %391 = vrot.lane.b32.xlu0 %v312, 116
      %v392 = vpop.permute.xlu0 %391
      %vm393 = vcmask 949248
      %v394 = vsel %vm393, %v384, %v386
      %v395 = vsel %vm393, %v386, %v388
      %v396 = vsel %vm393, %v388, %v390
      %v397 = vsel %vm393, %v390, %v392
      %398 = vrot.lane.b32.xlu0 %v328, 108
      %v399 = vpop.permute.xlu0 %398
      %400 = vrot.lane.b32.xlu0 %v329, 108
      %v401 = vpop.permute.xlu0 %400
      %402 = vrot.lane.b32.xlu0 %v330, 108
      %v403 = vpop.permute.xlu0 %402
      %404 = vrot.lane.b32.xlu0 %v331, 108
      %v405 = vpop.permute.xlu0 %404
      %406 = vrot.lane.b32.xlu0 %v332, 108
      %v407 = vpop.permute.xlu0 %406
      %vm408 = vcmask 883712
      %v409 = vsel %vm408, %v399, %v401
      %v410 = vsel %vm408, %v401, %v403
      %v411 = vsel %vm408, %v403, %v405
      %v412 = vsel %vm408, %v405, %v407
      %413 = vrot.lane.b32.xlu0 %v348, 107
      %v414 = vpop.permute.xlu0 %413
      %415 = vrot.lane.b32.xlu0 %v349, 107
      %v416 = vpop.permute.xlu0 %415
      %417 = vrot.lane.b32.xlu0 %v350, 107
      %v418 = vpop.permute.xlu0 %417
      %419 = vrot.lane.b32.xlu0 %v351, 107
      %v420 = vpop.permute.xlu0 %419
      %421 = vrot.lane.b32.xlu0 %v352, 107
      %v422 = vpop.permute.xlu0 %421
      %vm423 = vcmask 875520
      %v424 = vsel %vm423, %v414, %v416
      %v425 = vsel %vm423, %v416, %v418
      %v426 = vsel %vm423, %v418, %v420
      %v427 = vsel %vm423, %v420, %v422
      %428 = vrot.lane.b32.xlu0 %v294, 106
      %v429 = vpop.permute.xlu0 %428
      %430 = vrot.lane.b32.xlu0 %v296, 106
      %v431 = vpop.permute.xlu0 %430
      %432 = vrot.lane.b32.xlu0 %v298, 106
      %v433 = vpop.permute.xlu0 %432
      %434 = vrot.lane.b32.xlu0 %v300, 106
      %v435 = vpop.permute.xlu0 %434
      %436 = vrot.lane.b32.xlu0 %v304, 106
      %v437 = vpop.permute.xlu0 %436
      %vm438 = vcmask 867328
      %v439 = vsel %vm438, %v429, %v431
      %v440 = vsel %vm438, %v431, %v433
      %v441 = vsel %vm438, %v433, %v435
      %v442 = vsel %vm438, %v435, %v437
      %443 = vrot.lane.b32.xlu0 %v308, 28
      %v444 = vpop.permute.xlu0 %443
      %445 = vrot.lane.b32.xlu0 %v309, 28
      %v446 = vpop.permute.xlu0 %445
      %447 = vrot.lane.b32.xlu0 %v310, 28
      %v448 = vpop.permute.xlu0 %447
      %449 = vrot.lane.b32.xlu0 %v311, 28
      %v450 = vpop.permute.xlu0 %449
      %451 = vrot.lane.b32.xlu0 %v312, 28
      %v452 = vpop.permute.xlu0 %451
      %vm453 = vcmask 228352
      %v454 = vsel %vm453, %v444, %v446
      %v455 = vsel %vm453, %v446, %v448
      %v456 = vsel %vm453, %v448, %v450
      %v457 = vsel %vm453, %v450, %v452
      %458 = vrot.lane.b32.xlu0 %v328, 27
      %v459 = vpop.permute.xlu0 %458
      %460 = vrot.lane.b32.xlu0 %v329, 27
      %v461 = vpop.permute.xlu0 %460
      %462 = vrot.lane.b32.xlu0 %v330, 27
      %v463 = vpop.permute.xlu0 %462
      %464 = vrot.lane.b32.xlu0 %v331, 27
      %v465 = vpop.permute.xlu0 %464
      %466 = vrot.lane.b32.xlu0 %v332, 27
      %v467 = vpop.permute.xlu0 %466
      %vm468 = vcmask 220160
      %v469 = vsel %vm468, %v459, %v461
      %v470 = vsel %vm468, %v461, %v463
      %v471 = vsel %vm468, %v463, %v465
      %v472 = vsel %vm468, %v465, %v467
      %473 = vrot.lane.b32.xlu0 %v348, 26
      %v474 = vpop.permute.xlu0 %473
      %475 = vrot.lane.b32.xlu0 %v349, 26
      %v476 = vpop.permute.xlu0 %475
      %477 = vrot.lane.b32.xlu0 %v350, 26
      %v478 = vpop.permute.xlu0 %477
      %479 = vrot.lane.b32.xlu0 %v351, 26
      %v480 = vpop.permute.xlu0 %479
      %481 = vrot.lane.b32.xlu0 %v352, 26
      %v482 = vpop.permute.xlu0 %481
      %vm483 = vcmask 211968
      %v484 = vsel %vm483, %v474, %v476
      %v485 = vsel %vm483, %v476, %v478
      %v486 = vsel %vm483, %v478, %v480
      %v487 = vsel %vm483, %v480, %v482
      %488 = vrot.lane.b32.xlu0 %v294, 18
      %v489 = vpop.permute.xlu0 %488
      %490 = vrot.lane.b32.xlu0 %v296, 18
      %v491 = vpop.permute.xlu0 %490
      %492 = vrot.lane.b32.xlu0 %v298, 18
      %v493 = vpop.permute.xlu0 %492
      %494 = vrot.lane.b32.xlu0 %v300, 18
      %v495 = vpop.permute.xlu0 %494
      %496 = vrot.lane.b32.xlu0 %v304, 18
      %v497 = vpop.permute.xlu0 %496
      %vm498 = vcmask 146432
      %v499 = vsel %vm498, %v489, %v491
      %v500 = vsel %vm498, %v491, %v493
      %v501 = vsel %vm498, %v493, %v495
      %v502 = vsel %vm498, %v495, %v497
      %503 = vrot.lane.b32.xlu0 %v308, 17
      %v504 = vpop.permute.xlu0 %503
      %505 = vrot.lane.b32.xlu0 %v309, 17
      %v506 = vpop.permute.xlu0 %505
      %507 = vrot.lane.b32.xlu0 %v310, 17
      %v508 = vpop.permute.xlu0 %507
      %509 = vrot.lane.b32.xlu0 %v311, 17
      %v510 = vpop.permute.xlu0 %509
      %511 = vrot.lane.b32.xlu0 %v312, 17
      %v512 = vpop.permute.xlu0 %511
      %vm513 = vcmask 138240
      %v514 = vsel %vm513, %v504, %v506
      %v515 = vsel %vm513, %v506, %v508
      %v516 = vsel %vm513, %v508, %v510
      %v517 = vsel %vm513, %v510, %v512
      %518 = vrot.lane.b32.xlu0 %v328, 16
      %v519 = vpop.permute.xlu0 %518
      %520 = vrot.lane.b32.xlu0 %v329, 16
      %v521 = vpop.permute.xlu0 %520
      %522 = vrot.lane.b32.xlu0 %v330, 16
      %v523 = vpop.permute.xlu0 %522
      %524 = vrot.lane.b32.xlu0 %v331, 16
      %v525 = vpop.permute.xlu0 %524
      %526 = vrot.lane.b32.xlu0 %v332, 16
      %v527 = vpop.permute.xlu0 %526
      %vm528 = vcmask 130048
      %v529 = vsel %vm528, %v519, %v521
      %v530 = vsel %vm528, %v521, %v523
      %v531 = vsel %vm528, %v523, %v525
      %v532 = vsel %vm528, %v525, %v527
      %533 = vrot.lane.b32.xlu0 %v348, 8
      %v534 = vpop.permute.xlu0 %533
      %535 = vrot.lane.b32.xlu0 %v349, 8
      %v536 = vpop.permute.xlu0 %535
      %537 = vrot.lane.b32.xlu0 %v350, 8
      %v538 = vpop.permute.xlu0 %537
      %539 = vrot.lane.b32.xlu0 %v351, 8
      %v540 = vpop.permute.xlu0 %539
      %541 = vrot.lane.b32.xlu0 %v352, 8
      %v542 = vpop.permute.xlu0 %541
      %vm543 = vcmask 64512
      %v544 = vsel %vm543, %v534, %v536
      %v545 = vsel %vm543, %v536, %v538
      %v546 = vsel %vm543, %v538, %v540
      %v547 = vsel %vm543, %v540, %v542
      %vm548 = vcmask 1041408
      %v550 = vsel %vm548, %v294, %v324
      %v552 = vsel %vm548, %v296, %v325
      %v554 = vsel %vm548, %v298, %v326
      %v556 = vsel %vm548, %v300, %v327
      %vm557 = vcmask 1043456
      %v559 = vsel %vm557, %v550, %v344
      %v561 = vsel %vm557, %v552, %v345
      %v563 = vsel %vm557, %v554, %v346
      %v565 = vsel %vm557, %v556, %v347
      %vm566 = vcmask 1045504
      %v568 = vsel %vm566, %v559, %v364
      %v571 = vsel %vm566, %v561, %v365
      %v574 = vsel %vm566, %v563, %v366
      %v577 = vsel %vm566, %v565, %v367
      %v581 = vsel %vm548, %v379, %v394
      %v584 = vsel %vm548, %v380, %v395
      %v587 = vsel %vm548, %v381, %v396
      %v590 = vsel %vm548, %v382, %v397
      %v592 = vsel %vm557, %v581, %v409
      %v594 = vsel %vm557, %v584, %v410
      %v596 = vsel %vm557, %v587, %v411
      %v598 = vsel %vm557, %v590, %v412
      %v600 = vsel %vm566, %v592, %v424
      %v603 = vsel %vm566, %v594, %v425
      %v606 = vsel %vm566, %v596, %v426
      %v609 = vsel %vm566, %v598, %v427
      %v613 = vsel %vm548, %v439, %v454
      %v616 = vsel %vm548, %v440, %v455
      %v619 = vsel %vm548, %v441, %v456
      %v622 = vsel %vm548, %v442, %v457
      %v624 = vsel %vm557, %v613, %v469
      %v626 = vsel %vm557, %v616, %v470
      %v628 = vsel %vm557, %v619, %v471
      %v630 = vsel %vm557, %v622, %v472
      %v632 = vsel %vm566, %v624, %v484
      %v635 = vsel %vm566, %v626, %v485
      %v638 = vsel %vm566, %v628, %v486
      %v641 = vsel %vm566, %v630, %v487
      %v645 = vsel %vm548, %v499, %v514
      %v648 = vsel %vm548, %v500, %v515
      %v651 = vsel %vm548, %v501, %v516
      %v654 = vsel %vm548, %v502, %v517
      %v656 = vsel %vm557, %v645, %v529
      %v658 = vsel %vm557, %v648, %v530
      %v660 = vsel %vm557, %v651, %v531
      %v662 = vsel %vm557, %v654, %v532
      %v664 = vsel %vm566, %v656, %v544
      %v667 = vsel %vm566, %v658, %v545
      %v670 = vsel %vm566, %v660, %v546
      %v673 = vsel %vm566, %v662, %v547
      %v675 = vrot.slane %v306, 4
      %676 = vrot.lane.b32.xlu0 %v329, 49
      %v677 = vpop.permute.xlu0 %676
      %678 = vrot.lane.b32.xlu0 %v330, 49
      %v679 = vpop.permute.xlu0 %678
      %680 = vrot.lane.b32.xlu0 %v331, 49
      %v681 = vpop.permute.xlu0 %680
      %682 = vrot.lane.b32.xlu0 %v332, 49
      %v683 = vpop.permute.xlu0 %682
      %684 = vrot.lane.b32.xlu0 %v675, 49
      %v685 = vpop.permute.xlu0 %684
      %vm686 = vcmask 400384
      %v687 = vsel %vm686, %v677, %v679
      %v688 = vsel %vm686, %v679, %v681
      %v689 = vsel %vm686, %v681, %v683
      %v690 = vsel %vm686, %v683, %v685
      %v691 = vrot.slane %v306, 2
      %692 = vrot.lane.b32.xlu0 %v349, 48
      %v693 = vpop.permute.xlu0 %692
      %694 = vrot.lane.b32.xlu0 %v350, 48
      %v695 = vpop.permute.xlu0 %694
      %696 = vrot.lane.b32.xlu0 %v351, 48
      %v697 = vpop.permute.xlu0 %696
      %698 = vrot.lane.b32.xlu0 %v352, 48
      %v699 = vpop.permute.xlu0 %698
      %700 = vrot.lane.b32.xlu0 %v691, 48
      %v701 = vpop.permute.xlu0 %700
      %vm702 = vcmask 392192
      %v703 = vsel %vm702, %v693, %v695
      %v704 = vsel %vm702, %v695, %v697
      %v705 = vsel %vm702, %v697, %v699
      %v706 = vsel %vm702, %v699, %v701
      %707 = vrot.lane.b32.xlu0 %v296, 47
      %v708 = vpop.permute.xlu0 %707
      %709 = vrot.lane.b32.xlu0 %v298, 47
      %v710 = vpop.permute.xlu0 %709
      %711 = vrot.lane.b32.xlu0 %v300, 47
      %v712 = vpop.permute.xlu0 %711
      %713 = vrot.lane.b32.xlu0 %v304, 47
      %v714 = vpop.permute.xlu0 %713
      %715 = vrot.lane.b32.xlu0 %v306, 47
      %v716 = vpop.permute.xlu0 %715
      %vm717 = vcmask 384000
      %v718 = vsel %vm717, %v708, %v710
      %v719 = vsel %vm717, %v710, %v712
      %v720 = vsel %vm717, %v712, %v714
      %v721 = vsel %vm717, %v714, %v716
      %v722 = vrot.slane %v306, 6
      %723 = vrot.lane.b32.xlu0 %v309, 39
      %v724 = vpop.permute.xlu0 %723
      %725 = vrot.lane.b32.xlu0 %v310, 39
      %v726 = vpop.permute.xlu0 %725
      %727 = vrot.lane.b32.xlu0 %v311, 39
      %v728 = vpop.permute.xlu0 %727
      %729 = vrot.lane.b32.xlu0 %v312, 39
      %v730 = vpop.permute.xlu0 %729
      %731 = vrot.lane.b32.xlu0 %v722, 39
      %v732 = vpop.permute.xlu0 %731
      %vm733 = vcmask 318464
      %v734 = vsel %vm733, %v724, %v726
      %v735 = vsel %vm733, %v726, %v728
      %v736 = vsel %vm733, %v728, %v730
      %v737 = vsel %vm733, %v730, %v732
      %738 = vrot.lane.b32.xlu0 %v329, 38
      %v739 = vpop.permute.xlu0 %738
      %740 = vrot.lane.b32.xlu0 %v330, 38
      %v741 = vpop.permute.xlu0 %740
      %742 = vrot.lane.b32.xlu0 %v331, 38
      %v743 = vpop.permute.xlu0 %742
      %744 = vrot.lane.b32.xlu0 %v332, 38
      %v745 = vpop.permute.xlu0 %744
      %746 = vrot.lane.b32.xlu0 %v675, 38
      %v747 = vpop.permute.xlu0 %746
      %vm748 = vcmask 310272
      %v749 = vsel %vm748, %v739, %v741
      %v750 = vsel %vm748, %v741, %v743
      %v751 = vsel %vm748, %v743, %v745
      %v752 = vsel %vm748, %v745, %v747
      %753 = vrot.lane.b32.xlu0 %v349, 37
      %v754 = vpop.permute.xlu0 %753
      %755 = vrot.lane.b32.xlu0 %v350, 37
      %v756 = vpop.permute.xlu0 %755
      %757 = vrot.lane.b32.xlu0 %v351, 37
      %v758 = vpop.permute.xlu0 %757
      %759 = vrot.lane.b32.xlu0 %v352, 37
      %v760 = vpop.permute.xlu0 %759
      %761 = vrot.lane.b32.xlu0 %v691, 37
      %v762 = vpop.permute.xlu0 %761
      %vm763 = vcmask 302080
      %v764 = vsel %vm763, %v754, %v756
      %v765 = vsel %vm763, %v756, %v758
      %v766 = vsel %vm763, %v758, %v760
      %v767 = vsel %vm763, %v760, %v762
      %768 = vrot.lane.b32.xlu0 %v296, 29
      %v769 = vpop.permute.xlu0 %768
      %770 = vrot.lane.b32.xlu0 %v298, 29
      %v771 = vpop.permute.xlu0 %770
      %772 = vrot.lane.b32.xlu0 %v300, 29
      %v773 = vpop.permute.xlu0 %772
      %774 = vrot.lane.b32.xlu0 %v304, 29
      %v775 = vpop.permute.xlu0 %774
      %776 = vrot.lane.b32.xlu0 %v306, 29
      %v777 = vpop.permute.xlu0 %776
      %vm778 = vcmask 236544
      %v779 = vsel %vm778, %v769, %v771
      %v780 = vsel %vm778, %v771, %v773
      %v781 = vsel %vm778, %v773, %v775
      %v782 = vsel %vm778, %v775, %v777
      %783 = vrot.lane.b32.xlu0 %v722, 28
      %v784 = vpop.permute.xlu0 %783
      %v785 = vsel %vm453, %v452, %v784
      %786 = vrot.lane.b32.xlu0 %v675, 27
      %v787 = vpop.permute.xlu0 %786
      %v788 = vsel %vm468, %v467, %v787
      %v790 = vsel %vm548, %v304, %v322
      %v792 = vsel %vm557, %v550, %v677
      %v794 = vsel %vm557, %v552, %v687
      %v796 = vsel %vm557, %v554, %v688
      %v798 = vsel %vm557, %v556, %v689
      %v800 = vsel %vm557, %v790, %v690
      %v802 = vsel %vm566, %v792, %v693
      %v804 = vsel %vm566, %v794, %v703
      %v806 = vsel %vm566, %v796, %v704
      %v808 = vsel %vm566, %v798, %v705
      %v810 = vsel %vm566, %v800, %v706
      %v813 = vsel %vm548, %v708, %v724
      %v816 = vsel %vm548, %v718, %v734
      %v819 = vsel %vm548, %v719, %v735
      %v822 = vsel %vm548, %v720, %v736
      %v825 = vsel %vm548, %v721, %v737
      %v827 = vsel %vm557, %v813, %v739
      %v829 = vsel %vm557, %v816, %v749
      %v831 = vsel %vm557, %v819, %v750
      %v833 = vsel %vm557, %v822, %v751
      %v835 = vsel %vm557, %v825, %v752
      %v837 = vsel %vm566, %v827, %v754
      %v839 = vsel %vm566, %v829, %v764
      %v841 = vsel %vm566, %v831, %v765
      %v843 = vsel %vm566, %v833, %v766
      %v845 = vsel %vm566, %v835, %v767
      %v848 = vsel %vm548, %v769, %v446
      %v850 = vsel %vm548, %v779, %v455
      %v852 = vsel %vm548, %v780, %v456
      %v854 = vsel %vm548, %v781, %v457
      %v857 = vsel %vm548, %v782, %v785
      %v859 = vsel %vm557, %v848, %v461
      %v860 = vsel %vm557, %v850, %v470
      %v861 = vsel %vm557, %v852, %v471
      %v862 = vsel %vm557, %v854, %v472
      %v864 = vsel %vm557, %v857, %v788
      %880 = vrot.lane.b32.xlu0 %v802, 7
      %v881 = vpop.permute.xlu0 %880
      %882 = vrot.lane.b32.xlu0 %v804, 7
      %v883 = vpop.permute.xlu0 %882
      %884 = vrot.lane.b32.xlu0 %v806, 7
      %v885 = vpop.permute.xlu0 %884
      %886 = vrot.lane.b32.xlu0 %v808, 7
      %v887 = vpop.permute.xlu0 %886
      %888 = vrot.lane.b32.xlu0 %v810, 7
      %v889 = vpop.permute.xlu0 %888
      %890 = vrot.lane.b32.xlu0 %v837, 7
      %v891 = vpop.permute.xlu0 %890
      %892 = vrot.lane.b32.xlu0 %v839, 7
      %v893 = vpop.permute.xlu0 %892
      %894 = vrot.lane.b32.xlu0 %v841, 7
      %v895 = vpop.permute.xlu0 %894
      %896 = vrot.lane.b32.xlu0 %v843, 7
      %v897 = vpop.permute.xlu0 %896
      %898 = vrot.lane.b32.xlu0 %v845, 7
      %v899 = vpop.permute.xlu0 %898
      %900 = vrot.lane.b32.xlu0 %v859, 7
      %v901 = vpop.permute.xlu0 %900
      %902 = vrot.lane.b32.xlu0 %v860, 7
      %v903 = vpop.permute.xlu0 %902
      %904 = vrot.lane.b32.xlu0 %v861, 7
      %v905 = vpop.permute.xlu0 %904
      %906 = vrot.lane.b32.xlu0 %v862, 7
      %v907 = vpop.permute.xlu0 %906
      %908 = vrot.lane.b32.xlu0 %v864, 7
      %v909 = vpop.permute.xlu0 %908
      %vm910 = vcmask 56320
      %v911 = vsel %vm910, %v881, %v883
      %v912 = vsel %vm910, %v883, %v885
      %v913 = vsel %vm910, %v885, %v887
      %v914 = vsel %vm910, %v887, %v889
      %v915 = vsel %vm910, %v891, %v893
      %v916 = vsel %vm910, %v893, %v895
      %v917 = vsel %vm910, %v895, %v897
      %v918 = vsel %vm910, %v897, %v899
      %v919 = vsel %vm910, %v901, %v903
      %v920 = vsel %vm910, %v903, %v905
      %v921 = vsel %vm910, %v905, %v907
      %v922 = vsel %vm910, %v907, %v909
      %v931 = vld [vmem:[%s2] sm:$0xf]
      %vm932 = vcmask 883712
      %v934 = vsel %vm932, %v931, 0
      %v937 = vsel %vm566, %v919, 0
      %v940 = vsel %vm566, %v920, 0
      %v943 = vsel %vm566, %v921, 0
      %v946 = vsel %vm566, %v922, 0
      %948 = vmatpush.bf16.msra.mxu0 0
      %949 = vmatpush.bf16.msra.mxu0 %v937
      %950 = vmatpush.bf16.msra.mxu0 %v915
      %951 = vmatpush.bf16.msra.mxu0 %v911
      %952 = vmatpush.bf16.msra.mxu0 %v664
      %953 = vmatpush.bf16.msra.mxu0 %v632
      %954 = vmatpush.bf16.msra.mxu0 %v600
      %955 = vmatpush.bf16.msra.mxu0 %v568
      %956 = vmatmul.bf16.gmra.mxu0 %v934
      %v957 = vpop.f32.mrf.mxu0
      %v958 = vadd.f32 0.0, %v957
      %v959 = vpop.f32.mrf.mxu0
      %960 = vdwg.mxu0
      %961 = vmatpush.bf16.msra.mxu0 0
      %962 = vmatpush.bf16.msra.mxu0 %v940
      %963 = vmatpush.bf16.msra.mxu0 %v916
      %964 = vmatpush.bf16.msra.mxu0 %v912
      %965 = vmatpush.bf16.msra.mxu0 %v667
      %966 = vmatpush.bf16.msra.mxu0 %v635
      %967 = vmatpush.bf16.msra.mxu0 %v603
      %968 = vmatpush.bf16.msra.mxu0 %v571
      %969 = vmatmul.bf16.gmra.mxu0 %v934
      %v970 = vpop.f32.mrf.mxu0
      %v971 = vadd.f32 0.0, %v970
      %v972 = vpop.f32.mrf.mxu0
      %973 = vdwg.mxu0
      %974 = vmatpush.bf16.msra.mxu0 0
      %975 = vmatpush.bf16.msra.mxu0 %v943
      %976 = vmatpush.bf16.msra.mxu0 %v917
      %977 = vmatpush.bf16.msra.mxu0 %v913
      %978 = vmatpush.bf16.msra.mxu0 %v670
      %979 = vmatpush.bf16.msra.mxu0 %v638
      %980 = vmatpush.bf16.msra.mxu0 %v606
      %981 = vmatpush.bf16.msra.mxu0 %v574
      %982 = vmatmul.bf16.gmra.mxu0 %v934
      %v983 = vpop.f32.mrf.mxu0
      %v984 = vadd.f32 0.0, %v983
      %v985 = vpop.f32.mrf.mxu0
      %986 = vdwg.mxu0
      %987 = vmatpush.bf16.msra.mxu0 0
      %988 = vmatpush.bf16.msra.mxu0 %v946
      %989 = vmatpush.bf16.msra.mxu0 %v918
      %990 = vmatpush.bf16.msra.mxu0 %v914
      %991 = vmatpush.bf16.msra.mxu0 %v673
      %992 = vmatpush.bf16.msra.mxu0 %v641
      %993 = vmatpush.bf16.msra.mxu0 %v609
      %994 = vmatpush.bf16.msra.mxu0 %v577
      %995 = vmatmul.bf16.gmra.mxu0 %v934
      %v996 = vpop.f32.mrf.mxu0
      %v997 = vadd.f32 0.0, %v996
      %v998 = vpop.f32.mrf.mxu0
      %999 = vdwg.mxu0
      %v1000 = vpack.c.bf16 %v971, %v958
      %v1001 = vpack.c.bf16 %v997, %v984
      %1002 = vst [vmem:[%s282] sm:$0xff] %v1000
      %1003 = vst [vmem:[%s282 + $0x8] sm:$0xff] %v1001
      %v1004 = vld [vmem:[%s276] sm:$0xf]
      %v1006 = vperm.slane %v1004, 0
      %v1007 = vperm.slane %v1004, 1
      %v1008 = vperm.slane %v1004, 2
      %v1009 = vperm.slane %v1004, 3
      %v1014 = vmul.f32 %v958, %v1006
      %v1015 = vmul.f32 %v971, %v1007
      %v1016 = vmul.f32 %v984, %v1008
      %v1017 = vmul.f32 %v997, %v1009
      %v1018 = vadd.f32 %v1014, %v1015
      %v1019 = vadd.f32 %v1018, %v1016
      %v1020 = vadd.f32 %v1019, %v1017
      %1021 = vadd.xlane.f32.xlu0 %v1020
      %v1022 = vpop.xlane.xlu0 %1021
      %v1023 = vmul.f32 %v1014, %v958
      %v1024 = vmul.f32 %v1015, %v971
      %v1025 = vmul.f32 %v1016, %v984
      %v1026 = vmul.f32 %v1017, %v997
      %v1027 = vadd.f32 %v1023, %v1024
      %v1028 = vadd.f32 %v1027, %v1025
      %v1029 = vadd.f32 %v1028, %v1026
      %1030 = vadd.xlane.f32.xlu0 %v1029
      %v1031 = vpop.xlane.xlu0 %1030
      %vm1032 = vcmask 7168
      %1033 = vst.msk [vmem:[%s288] sm:$0xff] %vm1032, %v1022
      %1034 = vst.msk [vmem:[%s288 + $0x8] sm:$0xff] %vm1032, %v1031
      %s1035 = smul.u32 4, %s17
      %p1036 = scmp.lt.s32.totalorder %s1035, 15
      %s1037 = scalar_select %p1036, %s1035, 15
      %s1038 = smul.addr %s1037, 4
      %s1039 = scalar_lea.vmem %s4, %s1038
      %p1040 = scmp.lt.s32.totalorder %s17, 3
      %s1041 = scalar_select %p1040, %s17, 3
      %s1042 = smul.addr %s1041, 2
      %s1043 = smul.addr %s1042, 8
      %s1044 = scalar_lea.vmem %s5, %s1043
      // Predicated region
      $region37: #{double_conv3d.4} parent=35 // pred_check
        %p1045 = pneg %p136
      $region38: #{double_conv3d.4} parent=35 // pred_check_branch
        %1047 = sbr.rel (%p1045) target = $region40
      $region39: #{double_conv3d.4} parent=35 // pred_region
        %s1048 = smul.u32 4, %s17
      $region40: #{double_conv3d.4} parent=35 // pred_fallthru
        _
      // Predicated region
      $region41: #{double_conv3d.4} parent=35 // pred_check
        %p1049 = pneg %p162
      $region42: #{double_conv3d.4} parent=35 // pred_check_branch
        %1051 = sbr.rel (%p1049) target = $region44
      $region43: #{double_conv3d.4} parent=35 // pred_region
        _
      $region44: #{double_conv3d.4} parent=35 // pred_fallthru
        _
    $region36: #{double_conv3d.4} parent=5 // pred_fallthru
      _
    %p1052 = scmp.le.s32.totalorder 2, %s12
    // Predicated region
    $region45: #{double_conv3d.4} parent=5 // pred_check
      %p1053 = pneg %p1052
    $region46: #{double_conv3d.4} parent=5 // pred_check_branch
      %1055 = sbr.rel (%p1053) target = $region48
    $region47: #{double_conv3d.4} parent=5 // pred_region
      %s1056 = ssub.s32 %s12, 2
      // Predicated region
      $region49: #{double_conv3d.4} parent=47 // pred_check
        %p1057 = pneg %p142
      $region50: #{double_conv3d.4} parent=47 // pred_check_branch
        %1059 = sbr.rel (%p1057) target = $region52
      $region51: #{double_conv3d.4} parent=47 // pred_region
        %s1060 = smul.u32 4, %s18
        %p1061 = scmp.lt.s32.totalorder %s1060, 15
        %s1062 = scalar_select %p1061, %s1060, 15
        %s1063 = smul.addr %s1062, 4
        %s1064 = scalar_lea.vmem %s4, %s1063
      $region52: #{double_conv3d.4} parent=47 // pred_fallthru
        _
      // Predicated region
      $region53: #{double_conv3d.4} parent=47 // pred_check
        %p1065 = pneg %p168
      $region54: #{double_conv3d.4} parent=47 // pred_check_branch
        %1067 = sbr.rel (%p1065) target = $region56
      $region55: #{double_conv3d.4} parent=47 // pred_region
        %p1068 = scmp.lt.s32.totalorder %s18, 3
        %s1069 = scalar_select %p1068, %s18, 3
        %s1070 = smul.addr %s1069, 2
        %s1071 = smul.addr %s1070, 8
        %s1072 = scalar_lea.vmem %s5, %s1071
      $region56: #{double_conv3d.4} parent=47 // pred_fallthru
        _
    $region48: #{double_conv3d.4} parent=5 // pred_fallthru
      _
  $region6: #{double_conv3d.4} parent=0 // loop_footer
    %s16 = sadd.s32 1, %s12
  $region7: #{double_conv3d.4} parent=0 // loop_footer_branch
    %11 = sbr.rel target = $region3
  $region8: #{double_conv3d.4} parent=0 // loop_exit
    _

// kernel: double_conv3d.6
$region0: #{double_conv3d.6}
  #allocation0 [shape = 'u32[]', space=smem, size = 0x4, offset = 0x4, fixed_abs, tag = 'smem constant byte address 0x4 - core index']
  #allocation1 [shape = 'u32[72,128]{1,0:T(1,128)}', space=vmem, size = 0x9000, scoped, tag = 'internal scratch']
  %s0 = inlined_call_operand.vmem [shape: bf16[8,2560], index: 0, kind: input, shape index: {}, may-alias: {0,1}]
  %s1 = inlined_call_operand.vmem [shape: bf16[8,2560], index: 1, kind: input, shape index: {}, may-alias: {0,1}]
  %s2 = inlined_call_operand.vmem [shape: bf16[8,216], index: 2, kind: input, shape index: {}]
  %s3 = inlined_call_operand.vmem [shape: f32[1,2048], index: 3, kind: input, shape index: {}]
  %s4 = inlined_call_operand.vmem [shape: f32[8,2048], index: 4, kind: output, shape index: {0}]
  %s5 = inlined_call_operand.vmem [shape: f32[4,16,1], index: 5, kind: output, shape index: {1}]
  %6 = xla_tuple %s4, %s5
  %s7 = sld [smem:[#allocation0]]
  $region57: #{double_conv3d.6} parent=0
    _
  %s9 = ssub.s32 1, %s7
  %s10 = scalar_select 0, %s9, %s7
  loop: start=0, step=1, limit=6
  $region2: #{double_conv3d.6} parent=0 // loop_pre_header
    _
  $region3: #{double_conv3d.6} parent=0 // loop_header
    %s12 = sphi 0, %s16
    %p13 = scmp.ge.s32.totalorder %s12, 6
    %s22 = sphi 0, %s24
    %s25 = sphi 0, %s22
    %s26 = sphi 0, %s25
    %s42 = sphi 0, %s26
    %s50 = sphi 0, %s52
    %s53 = sphi 0, %s50
    %s54 = sphi 0, %s53
    %s70 = sphi 0, %s54
    %s74 = sphi 0, %s74
    %s76 = sphi 0, %s74
    %s77 = sphi 0, %s76
    %s91 = sphi 0, %s77
    %s97 = sphi 0, %s99
    %s100 = sphi 0, %s97
    %s101 = sphi 0, %s100
    %s117 = sphi 0, %s101
    %s123 = sphi 0, %s125
    %s126 = sphi 0, %s123
    %s127 = sphi 0, %s126
    %s143 = sphi 0, %s127
    %s149 = sphi 0, %s151
    %s152 = sphi 0, %s149
    %s153 = sphi 0, %s152
    %s169 = sphi 0, %s153
  $region4: #{double_conv3d.6} parent=0 // loop_header_branch
    %15 = sbr.rel (%p13) target = $region8
  $region5: #{double_conv3d.6} parent=0 // loop_body
    %s17 = ssub.s32 %s12, 1
    %s18 = ssub.s32 %s12, 2
    %s19 = sadd.s32 %s12, 1
    %s20 = ssub.s32 %s12, %s19
    %p21 = scmp.eq.s32.totalorder %s20, 0
    %s23 = sadd.s32 %s22, 1
    %s24 = scalar_select %p21, %s22, %s23
    %p27 = pneg %p21
    %p28 = scmp.eq.s32.totalorder %s12, 3
    %p29 = por %p27, %p28
    %p30 = scmp.ne.s32.totalorder %s22, %s25
    %p31 = scmp.eq.s32.totalorder %s12, 0
    %p32 = por %p30, %p31
    %p33 = scmp.ne.s32.totalorder %s22, %s25
    %p34 = scmp.eq.s32.totalorder %s17, 3
    %p35 = por %p33, %p34
    %p36 = scmp.ne.s32.totalorder %s25, %s26
    %p37 = scmp.eq.s32.totalorder %s17, 0
    %p38 = por %p36, %p37
    %p39 = scmp.ne.s32.totalorder %s25, %s26
    %p40 = scmp.eq.s32.totalorder %s18, 3
    %p41 = por %p39, %p40
    %p43 = scmp.ne.s32.totalorder %s26, %s42
    %p44 = scmp.eq.s32.totalorder %s18, 0
    %p45 = por %p43, %p44
    %s46 = sadd.s32 %s12, 1
    %s47 = sadd.s32 %s19, 1
    %s48 = ssub.s32 %s46, %s47
    %p49 = scmp.eq.s32.totalorder %s48, 0
    %s51 = sadd.s32 %s50, 1
    %s52 = scalar_select %p49, %s50, %s51
    %p55 = pneg %p49
    %p56 = scmp.eq.s32.totalorder %s12, 3
    %p57 = por %p55, %p56
    %p58 = scmp.ne.s32.totalorder %s50, %s53
    %p59 = scmp.eq.s32.totalorder %s12, 0
    %p60 = por %p58, %p59
    %p61 = scmp.ne.s32.totalorder %s50, %s53
    %p62 = scmp.eq.s32.totalorder %s17, 3
    %p63 = por %p61, %p62
    %p64 = scmp.ne.s32.totalorder %s53, %s54
    %p65 = scmp.eq.s32.totalorder %s17, 0
    %p66 = por %p64, %p65
    %p67 = scmp.ne.s32.totalorder %s53, %s54
    %p68 = scmp.eq.s32.totalorder %s18, 3
    %p69 = por %p67, %p68
    %p71 = scmp.ne.s32.totalorder %s54, %s70
    %p72 = scmp.eq.s32.totalorder %s18, 0
    %p73 = por %p71, %p72
    %s75 = sadd.s32 %s74, 1
    %p78 = scmp.eq.s32.totalorder %s12, 3
    %p79 = scmp.ne.s32.totalorder %s74, %s76
    %p80 = scmp.eq.s32.totalorder %s12, 0
    %p81 = por %p79, %p80
    %p82 = scmp.ne.s32.totalorder %s74, %s76
    %p83 = scmp.eq.s32.totalorder %s17, 3
    %p84 = por %p82, %p83
    %p85 = scmp.ne.s32.totalorder %s76, %s77
    %p86 = scmp.eq.s32.totalorder %s17, 0
    %p87 = por %p85, %p86
    %p88 = scmp.ne.s32.totalorder %s76, %s77
    %p89 = scmp.eq.s32.totalorder %s18, 3
    %p90 = por %p88, %p89
    %p92 = scmp.ne.s32.totalorder %s77, %s91
    %p93 = scmp.eq.s32.totalorder %s18, 0
    %p94 = por %p92, %p93
    %s95 = ssub.s32 %s12, %s19
    %p96 = scmp.eq.s32.totalorder %s95, 0
    %s98 = sadd.s32 %s97, 1
    %s99 = scalar_select %p96, %s97, %s98
    %p102 = pneg %p96
    %p103 = scmp.eq.s32.totalorder %s12, 3
    %p104 = por %p102, %p103
    %p105 = scmp.ne.s32.totalorder %s97, %s100
    %p106 = scmp.eq.s32.totalorder %s12, 0
    %p107 = por %p105, %p106
    %p108 = scmp.ne.s32.totalorder %s97, %s100
    %p109 = scmp.eq.s32.totalorder %s17, 3
    %p110 = por %p108, %p109
    %p111 = scmp.ne.s32.totalorder %s100, %s101
    %p112 = scmp.eq.s32.totalorder %s17, 0
    %p113 = por %p111, %p112
    %p114 = scmp.ne.s32.totalorder %s100, %s101
    %p115 = scmp.eq.s32.totalorder %s18, 3
    %p116 = por %p114, %p115
    %p118 = scmp.ne.s32.totalorder %s101, %s117
    %p119 = scmp.eq.s32.totalorder %s18, 0
    %p120 = por %p118, %p119
    %s121 = ssub.s32 %s12, %s19
    %p122 = scmp.eq.s32.totalorder %s121, 0
    %s124 = sadd.s32 %s123, 1
    %s125 = scalar_select %p122, %s123, %s124
    %p128 = pneg %p122
    %p129 = scmp.eq.s32.totalorder %s12, 3
    %p130 = por %p128, %p129
    %p131 = scmp.ne.s32.totalorder %s123, %s126
    %p132 = scmp.eq.s32.totalorder %s12, 0
    %p133 = por %p131, %p132
    %p134 = scmp.ne.s32.totalorder %s123, %s126
    %p135 = scmp.eq.s32.totalorder %s17, 3
    %p136 = por %p134, %p135
    %p137 = scmp.ne.s32.totalorder %s126, %s127
    %p138 = scmp.eq.s32.totalorder %s17, 0
    %p139 = por %p137, %p138
    %p140 = scmp.ne.s32.totalorder %s126, %s127
    %p141 = scmp.eq.s32.totalorder %s18, 3
    %p142 = por %p140, %p141
    %p144 = scmp.ne.s32.totalorder %s127, %s143
    %p145 = scmp.eq.s32.totalorder %s18, 0
    %p146 = por %p144, %p145
    %s147 = ssub.s32 %s12, %s19
    %p148 = scmp.eq.s32.totalorder %s147, 0
    %s150 = sadd.s32 %s149, 1
    %s151 = scalar_select %p148, %s149, %s150
    %p154 = pneg %p148
    %p155 = scmp.eq.s32.totalorder %s12, 3
    %p156 = por %p154, %p155
    %p157 = scmp.ne.s32.totalorder %s149, %s152
    %p158 = scmp.eq.s32.totalorder %s12, 0
    %p159 = por %p157, %p158
    %p160 = scmp.ne.s32.totalorder %s149, %s152
    %p161 = scmp.eq.s32.totalorder %s17, 3
    %p162 = por %p160, %p161
    %p163 = scmp.ne.s32.totalorder %s152, %s153
    %p164 = scmp.eq.s32.totalorder %s17, 0
    %p165 = por %p163, %p164
    %p166 = scmp.ne.s32.totalorder %s152, %s153
    %p167 = scmp.eq.s32.totalorder %s18, 3
    %p168 = por %p166, %p167
    %p170 = scmp.ne.s32.totalorder %s153, %s169
    %p171 = scmp.eq.s32.totalorder %s18, 0
    %p172 = por %p170, %p171
    %p173 = scmp.le.s32.totalorder 1, %s12
    %p174 = scmp.lt.s32.totalorder %s12, 5
    %p175 = pnand %p173, %p174
    %p176 = pneg %p175
    // Predicated region
    $region9: #{double_conv3d.6} parent=5 // pred_check
      _
    $region10: #{double_conv3d.6} parent=5 // pred_check_branch
      %178 = sbr.rel (%p175) target = $region12
    $region11: #{double_conv3d.6} parent=5 // pred_region
      %s179 = ssub.s32 %s12, 1
      // Predicated region
      $region13: #{double_conv3d.6} parent=11 // pred_check
        %p180 = pneg %p87
      $region14: #{double_conv3d.6} parent=11 // pred_check_branch
        %182 = sbr.rel (%p180) target = $region16
      $region15: #{double_conv3d.6} parent=11 // pred_region
        _
      $region16: #{double_conv3d.6} parent=11 // pred_fallthru
        _
    $region12: #{double_conv3d.6} parent=5 // pred_fallthru
      _
    %p183 = scmp.lt.s32.totalorder %s12, 4
    // Predicated region
    $region17: #{double_conv3d.6} parent=5 // pred_check
      %p184 = pneg %p183
    $region18: #{double_conv3d.6} parent=5 // pred_check_branch
      %186 = sbr.rel (%p184) target = $region20
    $region19: #{double_conv3d.6} parent=5 // pred_region
      // Predicated region
      $region21: #{double_conv3d.6} parent=19 // pred_check
        %p187 = pneg %p32
      $region22: #{double_conv3d.6} parent=19 // pred_check_branch
        %189 = sbr.rel (%p187) target = $region24
      $region23: #{double_conv3d.6} parent=19 // pred_region
        %s190 = smul.u32 4, %s12
        %p191 = scmp.lt.s32.totalorder %s190, 19
        %s192 = scalar_select %p191, %s190, 19
        %s193 = smul.addr %s192, 4
        %s194 = scalar_lea.vmem %s0, %s193
        %s195 = smul.u32 4, %s12
      $region24: #{double_conv3d.6} parent=19 // pred_fallthru
        _
      // Predicated region
      $region25: #{double_conv3d.6} parent=19 // pred_check
        %p196 = pneg %p60
      $region26: #{double_conv3d.6} parent=19 // pred_check_branch
        %198 = sbr.rel (%p196) target = $region28
      $region27: #{double_conv3d.6} parent=19 // pred_region
        %s199 = sadd.s32 %s12, 1
        %s200 = smul.u32 4, %s199
        %p201 = scmp.lt.s32.totalorder %s200, 19
        %s202 = scalar_select %p201, %s200, 19
        %s203 = smul.addr %s202, 4
        %s204 = scalar_lea.vmem %s1, %s203
        %s205 = sadd.s32 %s12, 1
        %s206 = smul.u32 4, %s205
      $region28: #{double_conv3d.6} parent=19 // pred_fallthru
        _
      // Predicated region
      $region29: #{double_conv3d.6} parent=19 // pred_check
        %p207 = pneg %p107
      $region30: #{double_conv3d.6} parent=19 // pred_check_branch
        %209 = sbr.rel (%p207) target = $region32
      $region31: #{double_conv3d.6} parent=19 // pred_region
        %s210 = smul.u32 4, %s12
        %p211 = scmp.lt.s32.totalorder %s210, 15
        %s212 = scalar_select %p211, %s210, 15
        %s213 = scalar_lea.vmem %s3, %s212
        %s214 = smul.u32 4, %s12
      $region32: #{double_conv3d.6} parent=19 // pred_fallthru
        _
    $region20: #{double_conv3d.6} parent=5 // pred_fallthru
      _
    %p215 = scmp.le.s32.totalorder 1, %s12
    %p216 = scmp.lt.s32.totalorder %s12, 5
    %p217 = pnand %p215, %p216
    %p218 = pneg %p217
    // Predicated region
    $region33: #{double_conv3d.6} parent=5 // pred_check
      _
    $region34: #{double_conv3d.6} parent=5 // pred_check_branch
      %220 = sbr.rel (%p217) target = $region36
    $region35: #{double_conv3d.6} parent=5 // pred_region
      %s221 = ssub.s32 %s12, 1
      %s222 = smul.u32 4, %s17
      %p223 = scmp.lt.s32.totalorder %s222, 19
      %s224 = scalar_select %p223, %s222, 19
      %s225 = smul.addr %s224, 4
      %s226 = scalar_lea.vmem %s0, %s225
      %p227 = pneg %p38
      %p228 = pneg %p35
      %s229 = sadd.s32 %s17, 1
      %s230 = smul.u32 4, %s229
      %p231 = scmp.lt.s32.totalorder %s230, 19
      %s232 = scalar_select %p231, %s230, 19
      %s233 = smul.addr %s232, 4
      %s234 = scalar_lea.vmem %s1, %s233
      %p235 = pneg %p66
      %p236 = pneg %p63
      %p237 = pneg %p87
      %p238 = pneg %p84
      %s239 = smul.u32 4, %s17
      %p240 = scmp.lt.s32.totalorder %s239, 15
      %s241 = scalar_select %p240, %s239, 15
      %s242 = scalar_lea.vmem %s3, %s241
      %p243 = pneg %p113
      %p244 = pneg %p110
      %p245 = pneg %p139
      %p246 = pneg %p136
      %s247 = smul.u32 4, %s17
      %p248 = scmp.lt.s32.totalorder %s247, 15
      %s249 = scalar_select %p248, %s247, 15
      %s250 = smul.addr %s249, 8
      %s251 = scalar_lea.vmem %s4, %s250
      %p252 = pneg %p165
      %p253 = pneg %p162
      %p254 = scmp.lt.s32.totalorder %s17, 3
      %s255 = scalar_select %p254, %s17, 3
      %s256 = smul.addr %s255, 2
      %s257 = smul.addr %s256, 8
      %s258 = scalar_lea.vmem %s5, %s257
      %s259 = smul.u32 4, %s17
      %p260 = scmp.lt.s32.totalorder %s259, 19
      %s261 = scalar_select %p260, %s259, 19
      %s262 = smul.addr %s261, 4
      %s263 = scalar_lea.vmem %s0, %s262
      %s264 = smul.u32 4, %s17
      %s265 = sadd.s32 %s17, 1
      %s266 = smul.u32 4, %s265
      %p267 = scmp.lt.s32.totalorder %s266, 19
      %s268 = scalar_select %p267, %s266, 19
      %s269 = smul.addr %s268, 4
      %s270 = scalar_lea.vmem %s1, %s269
      %s271 = sadd.s32 %s17, 1
      %s272 = smul.u32 4, %s271
      %s273 = smul.u32 4, %s17
      %p274 = scmp.lt.s32.totalorder %s273, 15
      %s275 = scalar_select %p274, %s273, 15
      %s276 = scalar_lea.vmem %s3, %s275
      %s277 = smul.u32 4, %s17
      %s278 = smul.u32 4, %s17
      %p279 = scmp.lt.s32.totalorder %s278, 15
      %s280 = scalar_select %p279, %s278, 15
      %s281 = smul.addr %s280, 8
      %s282 = scalar_lea.vmem %s4, %s281
      %s283 = smul.u32 4, %s17
      %p284 = scmp.lt.s32.totalorder %s17, 3
      %s285 = scalar_select %p284, %s17, 3
      %s286 = smul.addr %s285, 2
      %s287 = smul.addr %s286, 8
      %s288 = scalar_lea.vmem %s5, %s287
      %v290 = vld [vmem:[%s263] sm:$0xff]
      %v291 = vld [vmem:[%s263 + $0x8] sm:$0xff]
      %v292 = vld [vmem:[%s270] sm:$0xff]
      %v295 = vunpack.c.l.b16 %v290
      %v296 = vunpack.c.h.b16 %v290
      %v297 = vunpack.c.l.b16 %v291
      %v298 = vunpack.c.h.b16 %v291
      %v299 = vpack.c.b16 %v295, %v295
      %v300 = vpack.c.b16 %v296, %v296
      %v301 = vpack.c.b16 %v297, %v297
      %v302 = vpack.c.b16 %v298, %v298
      %v304 = vunpack.c.l.b16 %v292
      %v305 = vunpack.c.h.b16 %v292
      %v306 = vpack.c.b16 %v304, %v304
      %v307 = vpack.c.b16 %v305, %v305
      %v308 = vrot.slane %v299, 4
      %v309 = vrot.slane %v300, 4
      %v310 = vrot.slane %v301, 4
      %v311 = vrot.slane %v302, 4
      %v312 = vrot.slane %v306, 4
      %313 = vrot.lane.b32.xlu0 %v308, 127
      %v314 = vpop.permute.xlu0 %313
      %315 = vrot.lane.b32.xlu0 %v309, 127
      %v316 = vpop.permute.xlu0 %315
      %317 = vrot.lane.b32.xlu0 %v310, 127
      %v318 = vpop.permute.xlu0 %317
      %319 = vrot.lane.b32.xlu0 %v311, 127
      %v320 = vpop.permute.xlu0 %319
      %321 = vrot.lane.b32.xlu0 %v312, 127
      %v322 = vpop.permute.xlu0 %321
      %vm323 = vcmask 1039360
      %v324 = vsel %vm323, %v314, %v316
      %v325 = vsel %vm323, %v316, %v318
      %v326 = vsel %vm323, %v318, %v320
      %v327 = vsel %vm323, %v320, %v322
      %328 = vrot.lane.b32.xlu0 %v299, 126
      %v329 = vpop.permute.xlu0 %328
      %330 = vrot.lane.b32.xlu0 %v300, 126
      %v331 = vpop.permute.xlu0 %330
      %332 = vrot.lane.b32.xlu0 %v301, 126
      %v333 = vpop.permute.xlu0 %332
      %334 = vrot.lane.b32.xlu0 %v302, 126
      %v335 = vpop.permute.xlu0 %334
      %336 = vrot.lane.b32.xlu0 %v306, 126
      %v337 = vpop.permute.xlu0 %336
      %vm338 = vcmask 1031168
      %v339 = vsel %vm338, %v329, %v331
      %v340 = vsel %vm338, %v331, %v333
      %v341 = vsel %vm338, %v333, %v335
      %v342 = vsel %vm338, %v335, %v337
      %343 = vrot.lane.b32.xlu0 %v308, 118
      %v344 = vpop.permute.xlu0 %343
      %345 = vrot.lane.b32.xlu0 %v309, 118
      %v346 = vpop.permute.xlu0 %345
      %347 = vrot.lane.b32.xlu0 %v310, 118
      %v348 = vpop.permute.xlu0 %347
      %349 = vrot.lane.b32.xlu0 %v311, 118
      %v350 = vpop.permute.xlu0 %349
      %351 = vrot.lane.b32.xlu0 %v312, 118
      %v352 = vpop.permute.xlu0 %351
      %vm353 = vcmask 965632
      %v354 = vsel %vm353, %v344, %v346
      %v355 = vsel %vm353, %v346, %v348
      %v356 = vsel %vm353, %v348, %v350
      %v357 = vsel %vm353, %v350, %v352
      %358 = vrot.lane.b32.xlu0 %v299, 117
      %v359 = vpop.permute.xlu0 %358
      %360 = vrot.lane.b32.xlu0 %v300, 117
      %v361 = vpop.permute.xlu0 %360
      %362 = vrot.lane.b32.xlu0 %v301, 117
      %v363 = vpop.permute.xlu0 %362
      %364 = vrot.lane.b32.xlu0 %v302, 117
      %v365 = vpop.permute.xlu0 %364
      %366 = vrot.lane.b32.xlu0 %v306, 117
      %v367 = vpop.permute.xlu0 %366
      %vm368 = vcmask 957440
      %v369 = vsel %vm368, %v359, %v361
      %v370 = vsel %vm368, %v361, %v363
      %v371 = vsel %vm368, %v363, %v365
      %v372 = vsel %vm368, %v365, %v367
      %373 = vrot.lane.b32.xlu0 %v308, 116
      %v374 = vpop.permute.xlu0 %373
      %375 = vrot.lane.b32.xlu0 %v309, 116
      %v376 = vpop.permute.xlu0 %375
      %377 = vrot.lane.b32.xlu0 %v310, 116
      %v378 = vpop.permute.xlu0 %377
      %379 = vrot.lane.b32.xlu0 %v311, 116
      %v380 = vpop.permute.xlu0 %379
      %381 = vrot.lane.b32.xlu0 %v312, 116
      %v382 = vpop.permute.xlu0 %381
      %vm383 = vcmask 949248
      %v384 = vsel %vm383, %v374, %v376
      %v385 = vsel %vm383, %v376, %v378
      %v386 = vsel %vm383, %v378, %v380
      %v387 = vsel %vm383, %v380, %v382
      %388 = vrot.lane.b32.xlu0 %v299, 108
      %v389 = vpop.permute.xlu0 %388
      %390 = vrot.lane.b32.xlu0 %v300, 108
      %v391 = vpop.permute.xlu0 %390
      %392 = vrot.lane.b32.xlu0 %v301, 108
      %v393 = vpop.permute.xlu0 %392
      %394 = vrot.lane.b32.xlu0 %v302, 108
      %v395 = vpop.permute.xlu0 %394
      %396 = vrot.lane.b32.xlu0 %v306, 108
      %v397 = vpop.permute.xlu0 %396
      %vm398 = vcmask 883712
      %v399 = vsel %vm398, %v389, %v391
      %v400 = vsel %vm398, %v391, %v393
      %v401 = vsel %vm398, %v393, %v395
      %v402 = vsel %vm398, %v395, %v397
      %403 = vrot.lane.b32.xlu0 %v308, 107
      %v404 = vpop.permute.xlu0 %403
      %405 = vrot.lane.b32.xlu0 %v309, 107
      %v406 = vpop.permute.xlu0 %405
      %407 = vrot.lane.b32.xlu0 %v310, 107
      %v408 = vpop.permute.xlu0 %407
      %409 = vrot.lane.b32.xlu0 %v311, 107
      %v410 = vpop.permute.xlu0 %409
      %411 = vrot.lane.b32.xlu0 %v312, 107
      %v412 = vpop.permute.xlu0 %411
      %vm413 = vcmask 875520
      %v414 = vsel %vm413, %v404, %v406
      %v415 = vsel %vm413, %v406, %v408
      %v416 = vsel %vm413, %v408, %v410
      %v417 = vsel %vm413, %v410, %v412
      %418 = vrot.lane.b32.xlu0 %v299, 106
      %v419 = vpop.permute.xlu0 %418
      %420 = vrot.lane.b32.xlu0 %v300, 106
      %v421 = vpop.permute.xlu0 %420
      %422 = vrot.lane.b32.xlu0 %v301, 106
      %v423 = vpop.permute.xlu0 %422
      %424 = vrot.lane.b32.xlu0 %v302, 106
      %v425 = vpop.permute.xlu0 %424
      %426 = vrot.lane.b32.xlu0 %v306, 106
      %v427 = vpop.permute.xlu0 %426
      %vm428 = vcmask 867328
      %v429 = vsel %vm428, %v419, %v421
      %v430 = vsel %vm428, %v421, %v423
      %v431 = vsel %vm428, %v423, %v425
      %v432 = vsel %vm428, %v425, %v427
      %433 = vrot.lane.b32.xlu0 %v308, 28
      %v434 = vpop.permute.xlu0 %433
      %435 = vrot.lane.b32.xlu0 %v309, 28
      %v436 = vpop.permute.xlu0 %435
      %437 = vrot.lane.b32.xlu0 %v310, 28
      %v438 = vpop.permute.xlu0 %437
      %439 = vrot.lane.b32.xlu0 %v311, 28
      %v440 = vpop.permute.xlu0 %439
      %441 = vrot.lane.b32.xlu0 %v312, 28
      %v442 = vpop.permute.xlu0 %441
      %vm443 = vcmask 228352
      %v444 = vsel %vm443, %v434, %v436
      %v445 = vsel %vm443, %v436, %v438
      %v446 = vsel %vm443, %v438, %v440
      %v447 = vsel %vm443, %v440, %v442
      %448 = vrot.lane.b32.xlu0 %v299, 27
      %v449 = vpop.permute.xlu0 %448
      %450 = vrot.lane.b32.xlu0 %v300, 27
      %v451 = vpop.permute.xlu0 %450
      %452 = vrot.lane.b32.xlu0 %v301, 27
      %v453 = vpop.permute.xlu0 %452
      %454 = vrot.lane.b32.xlu0 %v302, 27
      %v455 = vpop.permute.xlu0 %454
      %456 = vrot.lane.b32.xlu0 %v306, 27
      %v457 = vpop.permute.xlu0 %456
      %vm458 = vcmask 220160
      %v459 = vsel %vm458, %v449, %v451
      %v460 = vsel %vm458, %v451, %v453
      %v461 = vsel %vm458, %v453, %v455
      %v462 = vsel %vm458, %v455, %v457
      %463 = vrot.lane.b32.xlu0 %v308, 26
      %v464 = vpop.permute.xlu0 %463
      %465 = vrot.lane.b32.xlu0 %v309, 26
      %v466 = vpop.permute.xlu0 %465
      %467 = vrot.lane.b32.xlu0 %v310, 26
      %v468 = vpop.permute.xlu0 %467
      %469 = vrot.lane.b32.xlu0 %v311, 26
      %v470 = vpop.permute.xlu0 %469
      %471 = vrot.lane.b32.xlu0 %v312, 26
      %v472 = vpop.permute.xlu0 %471
      %vm473 = vcmask 211968
      %v474 = vsel %vm473, %v464, %v466
      %v475 = vsel %vm473, %v466, %v468
      %v476 = vsel %vm473, %v468, %v470
      %v477 = vsel %vm473, %v470, %v472
      %478 = vrot.lane.b32.xlu0 %v299, 18
      %v479 = vpop.permute.xlu0 %478
      %480 = vrot.lane.b32.xlu0 %v300, 18
      %v481 = vpop.permute.xlu0 %480
      %482 = vrot.lane.b32.xlu0 %v301, 18
      %v483 = vpop.permute.xlu0 %482
      %484 = vrot.lane.b32.xlu0 %v302, 18
      %v485 = vpop.permute.xlu0 %484
      %486 = vrot.lane.b32.xlu0 %v306, 18
      %v487 = vpop.permute.xlu0 %486
      %vm488 = vcmask 146432
      %v489 = vsel %vm488, %v479, %v481
      %v490 = vsel %vm488, %v481, %v483
      %v491 = vsel %vm488, %v483, %v485
      %v492 = vsel %vm488, %v485, %v487
      %493 = vrot.lane.b32.xlu0 %v308, 17
      %v494 = vpop.permute.xlu0 %493
      %495 = vrot.lane.b32.xlu0 %v309, 17
      %v496 = vpop.permute.xlu0 %495
      %497 = vrot.lane.b32.xlu0 %v310, 17
      %v498 = vpop.permute.xlu0 %497
      %499 = vrot.lane.b32.xlu0 %v311, 17
      %v500 = vpop.permute.xlu0 %499
      %501 = vrot.lane.b32.xlu0 %v312, 17
      %v502 = vpop.permute.xlu0 %501
      %vm503 = vcmask 138240
      %v504 = vsel %vm503, %v494, %v496
      %v505 = vsel %vm503, %v496, %v498
      %v506 = vsel %vm503, %v498, %v500
      %v507 = vsel %vm503, %v500, %v502
      %508 = vrot.lane.b32.xlu0 %v299, 16
      %v509 = vpop.permute.xlu0 %508
      %510 = vrot.lane.b32.xlu0 %v300, 16
      %v511 = vpop.permute.xlu0 %510
      %512 = vrot.lane.b32.xlu0 %v301, 16
      %v513 = vpop.permute.xlu0 %512
      %514 = vrot.lane.b32.xlu0 %v302, 16
      %v515 = vpop.permute.xlu0 %514
      %516 = vrot.lane.b32.xlu0 %v306, 16
      %v517 = vpop.permute.xlu0 %516
      %vm518 = vcmask 130048
      %v519 = vsel %vm518, %v509, %v511
      %v520 = vsel %vm518, %v511, %v513
      %v521 = vsel %vm518, %v513, %v515
      %v522 = vsel %vm518, %v515, %v517
      %523 = vrot.lane.b32.xlu0 %v308, 8
      %v524 = vpop.permute.xlu0 %523
      %525 = vrot.lane.b32.xlu0 %v309, 8
      %v526 = vpop.permute.xlu0 %525
      %527 = vrot.lane.b32.xlu0 %v310, 8
      %v528 = vpop.permute.xlu0 %527
      %529 = vrot.lane.b32.xlu0 %v311, 8
      %v530 = vpop.permute.xlu0 %529
      %531 = vrot.lane.b32.xlu0 %v312, 8
      %v532 = vpop.permute.xlu0 %531
      %vm533 = vcmask 64512
      %v534 = vsel %vm533, %v524, %v526
      %v535 = vsel %vm533, %v526, %v528
      %v536 = vsel %vm533, %v528, %v530
      %v537 = vsel %vm533, %v530, %v532
      %vm538 = vcmask 1043456
      %v541 = vsel %vm538, %v299, %v324
      %v545 = vsel %vm538, %v300, %v325
      %v549 = vsel %vm538, %v301, %v326
      %v553 = vsel %vm538, %v302, %v327
      %v557 = vsel %vm538, %v339, %v354
      %v561 = vsel %vm538, %v340, %v355
      %v565 = vsel %vm538, %v341, %v356
      %v569 = vsel %vm538, %v342, %v357
      %v573 = vsel %vm538, %v369, %v384
      %v577 = vsel %vm538, %v370, %v385
      %v581 = vsel %vm538, %v371, %v386
      %v585 = vsel %vm538, %v372, %v387
      %v589 = vsel %vm538, %v399, %v414
      %v593 = vsel %vm538, %v400, %v415
      %v597 = vsel %vm538, %v401, %v416
      %v601 = vsel %vm538, %v402, %v417
      %v605 = vsel %vm538, %v429, %v444
      %v609 = vsel %vm538, %v430, %v445
      %v613 = vsel %vm538, %v431, %v446
      %v617 = vsel %vm538, %v432, %v447
      %v621 = vsel %vm538, %v459, %v474
      %v625 = vsel %vm538, %v460, %v475
      %v629 = vsel %vm538, %v461, %v476
      %v633 = vsel %vm538, %v462, %v477
      %v637 = vsel %vm538, %v489, %v504
      %v641 = vsel %vm538, %v490, %v505
      %v645 = vsel %vm538, %v491, %v506
      %v649 = vsel %vm538, %v492, %v507
      %v653 = vsel %vm538, %v519, %v534
      %v657 = vsel %vm538, %v520, %v535
      %v661 = vsel %vm538, %v521, %v536
      %v665 = vsel %vm538, %v522, %v537
      %667 = vrot.lane.b32.xlu0 %v300, 49
      %v668 = vpop.permute.xlu0 %667
      %669 = vrot.lane.b32.xlu0 %v301, 49
      %v670 = vpop.permute.xlu0 %669
      %671 = vrot.lane.b32.xlu0 %v302, 49
      %v672 = vpop.permute.xlu0 %671
      %673 = vrot.lane.b32.xlu0 %v306, 49
      %v674 = vpop.permute.xlu0 %673
      %675 = vrot.lane.b32.xlu0 %v307, 49
      %v676 = vpop.permute.xlu0 %675
      %vm677 = vcmask 400384
      %v678 = vsel %vm677, %v668, %v670
      %v679 = vsel %vm677, %v670, %v672
      %v680 = vsel %vm677, %v672, %v674
      %v681 = vsel %vm677, %v674, %v676
      %v682 = vrot.slane %v307, 4
      %683 = vrot.lane.b32.xlu0 %v309, 48
      %v684 = vpop.permute.xlu0 %683
      %685 = vrot.lane.b32.xlu0 %v310, 48
      %v686 = vpop.permute.xlu0 %685
      %687 = vrot.lane.b32.xlu0 %v311, 48
      %v688 = vpop.permute.xlu0 %687
      %689 = vrot.lane.b32.xlu0 %v312, 48
      %v690 = vpop.permute.xlu0 %689
      %691 = vrot.lane.b32.xlu0 %v682, 48
      %v692 = vpop.permute.xlu0 %691
      %vm693 = vcmask 392192
      %v694 = vsel %vm693, %v684, %v686
      %v695 = vsel %vm693, %v686, %v688
      %v696 = vsel %vm693, %v688, %v690
      %v697 = vsel %vm693, %v690, %v692
      %698 = vrot.lane.b32.xlu0 %v300, 47
      %v699 = vpop.permute.xlu0 %698
      %700 = vrot.lane.b32.xlu0 %v301, 47
      %v701 = vpop.permute.xlu0 %700
      %702 = vrot.lane.b32.xlu0 %v302, 47
      %v703 = vpop.permute.xlu0 %702
      %704 = vrot.lane.b32.xlu0 %v306, 47
      %v705 = vpop.permute.xlu0 %704
      %706 = vrot.lane.b32.xlu0 %v307, 47
      %v707 = vpop.permute.xlu0 %706
      %vm708 = vcmask 384000
      %v709 = vsel %vm708, %v699, %v701
      %v710 = vsel %vm708, %v701, %v703
      %v711 = vsel %vm708, %v703, %v705
      %v712 = vsel %vm708, %v705, %v707
      %713 = vrot.lane.b32.xlu0 %v309, 39
      %v714 = vpop.permute.xlu0 %713
      %715 = vrot.lane.b32.xlu0 %v310, 39
      %v716 = vpop.permute.xlu0 %715
      %717 = vrot.lane.b32.xlu0 %v311, 39
      %v718 = vpop.permute.xlu0 %717
      %719 = vrot.lane.b32.xlu0 %v312, 39
      %v720 = vpop.permute.xlu0 %719
      %721 = vrot.lane.b32.xlu0 %v682, 39
      %v722 = vpop.permute.xlu0 %721
      %vm723 = vcmask 318464
      %v724 = vsel %vm723, %v714, %v716
      %v725 = vsel %vm723, %v716, %v718
      %v726 = vsel %vm723, %v718, %v720
      %v727 = vsel %vm723, %v720, %v722
      %728 = vrot.lane.b32.xlu0 %v300, 38
      %v729 = vpop.permute.xlu0 %728
      %730 = vrot.lane.b32.xlu0 %v301, 38
      %v731 = vpop.permute.xlu0 %730
      %732 = vrot.lane.b32.xlu0 %v302, 38
      %v733 = vpop.permute.xlu0 %732
      %734 = vrot.lane.b32.xlu0 %v306, 38
      %v735 = vpop.permute.xlu0 %734
      %736 = vrot.lane.b32.xlu0 %v307, 38
      %v737 = vpop.permute.xlu0 %736
      %vm738 = vcmask 310272
      %v739 = vsel %vm738, %v729, %v731
      %v740 = vsel %vm738, %v731, %v733
      %v741 = vsel %vm738, %v733, %v735
      %v742 = vsel %vm738, %v735, %v737
      %743 = vrot.lane.b32.xlu0 %v309, 37
      %v744 = vpop.permute.xlu0 %743
      %745 = vrot.lane.b32.xlu0 %v310, 37
      %v746 = vpop.permute.xlu0 %745
      %747 = vrot.lane.b32.xlu0 %v311, 37
      %v748 = vpop.permute.xlu0 %747
      %749 = vrot.lane.b32.xlu0 %v312, 37
      %v750 = vpop.permute.xlu0 %749
      %751 = vrot.lane.b32.xlu0 %v682, 37
      %v752 = vpop.permute.xlu0 %751
      %vm753 = vcmask 302080
      %v754 = vsel %vm753, %v744, %v746
      %v755 = vsel %vm753, %v746, %v748
      %v756 = vsel %vm753, %v748, %v750
      %v757 = vsel %vm753, %v750, %v752
      %758 = vrot.lane.b32.xlu0 %v300, 29
      %v759 = vpop.permute.xlu0 %758
      %760 = vrot.lane.b32.xlu0 %v301, 29
      %v761 = vpop.permute.xlu0 %760
      %762 = vrot.lane.b32.xlu0 %v302, 29
      %v763 = vpop.permute.xlu0 %762
      %764 = vrot.lane.b32.xlu0 %v306, 29
      %v765 = vpop.permute.xlu0 %764
      %766 = vrot.lane.b32.xlu0 %v307, 29
      %v767 = vpop.permute.xlu0 %766
      %vm768 = vcmask 236544
      %v769 = vsel %vm768, %v759, %v761
      %v770 = vsel %vm768, %v761, %v763
      %v771 = vsel %vm768, %v763, %v765
      %v772 = vsel %vm768, %v765, %v767
      %773 = vrot.lane.b32.xlu0 %v682, 28
      %v774 = vpop.permute.xlu0 %773
      %v775 = vsel %vm443, %v442, %v774
      %776 = vrot.lane.b32.xlu0 %v307, 27
      %v777 = vpop.permute.xlu0 %776
      %v778 = vsel %vm458, %v457, %v777
      %v781 = vsel %vm538, %v306, %v322
      %v784 = vsel %vm538, %v668, %v684
      %v787 = vsel %vm538, %v678, %v694
      %v790 = vsel %vm538, %v679, %v695
      %v793 = vsel %vm538, %v680, %v696
      %v796 = vsel %vm538, %v681, %v697
      %v799 = vsel %vm538, %v699, %v714
      %v802 = vsel %vm538, %v709, %v724
      %v805 = vsel %vm538, %v710, %v725
      %v808 = vsel %vm538, %v711, %v726
      %v811 = vsel %vm538, %v712, %v727
      %v814 = vsel %vm538, %v729, %v744
      %v817 = vsel %vm538, %v739, %v754
      %v820 = vsel %vm538, %v740, %v755
      %v823 = vsel %vm538, %v741, %v756
      %v826 = vsel %vm538, %v742, %v757
      %v829 = vsel %vm538, %v759, %v436
      %v831 = vsel %vm538, %v769, %v445
      %v833 = vsel %vm538, %v770, %v446
      %v835 = vsel %vm538, %v771, %v447
      %v838 = vsel %vm538, %v772, %v775
      %864 = vrot.lane.b32.xlu0 %v541, 7
      %v865 = vpop.permute.xlu0 %864
      %866 = vrot.lane.b32.xlu0 %v545, 7
      %v867 = vpop.permute.xlu0 %866
      %868 = vrot.lane.b32.xlu0 %v549, 7
      %v869 = vpop.permute.xlu0 %868
      %870 = vrot.lane.b32.xlu0 %v553, 7
      %v871 = vpop.permute.xlu0 %870
      %872 = vrot.lane.b32.xlu0 %v781, 7
      %v873 = vpop.permute.xlu0 %872
      %874 = vrot.lane.b32.xlu0 %v784, 7
      %v875 = vpop.permute.xlu0 %874
      %876 = vrot.lane.b32.xlu0 %v787, 7
      %v877 = vpop.permute.xlu0 %876
      %878 = vrot.lane.b32.xlu0 %v790, 7
      %v879 = vpop.permute.xlu0 %878
      %880 = vrot.lane.b32.xlu0 %v793, 7
      %v881 = vpop.permute.xlu0 %880
      %882 = vrot.lane.b32.xlu0 %v796, 7
      %v883 = vpop.permute.xlu0 %882
      %884 = vrot.lane.b32.xlu0 %v799, 7
      %v885 = vpop.permute.xlu0 %884
      %886 = vrot.lane.b32.xlu0 %v802, 7
      %v887 = vpop.permute.xlu0 %886
      %888 = vrot.lane.b32.xlu0 %v805, 7
      %v889 = vpop.permute.xlu0 %888
      %890 = vrot.lane.b32.xlu0 %v808, 7
      %v891 = vpop.permute.xlu0 %890
      %892 = vrot.lane.b32.xlu0 %v811, 7
      %v893 = vpop.permute.xlu0 %892
      %894 = vrot.lane.b32.xlu0 %v814, 7
      %v895 = vpop.permute.xlu0 %894
      %896 = vrot.lane.b32.xlu0 %v817, 7
      %v897 = vpop.permute.xlu0 %896
      %898 = vrot.lane.b32.xlu0 %v820, 7
      %v899 = vpop.permute.xlu0 %898
      %900 = vrot.lane.b32.xlu0 %v823, 7
      %v901 = vpop.permute.xlu0 %900
      %902 = vrot.lane.b32.xlu0 %v826, 7
      %v903 = vpop.permute.xlu0 %902
      %904 = vrot.lane.b32.xlu0 %v829, 7
      %v905 = vpop.permute.xlu0 %904
      %906 = vrot.lane.b32.xlu0 %v831, 7
      %v907 = vpop.permute.xlu0 %906
      %908 = vrot.lane.b32.xlu0 %v833, 7
      %v909 = vpop.permute.xlu0 %908
      %910 = vrot.lane.b32.xlu0 %v835, 7
      %v911 = vpop.permute.xlu0 %910
      %912 = vrot.lane.b32.xlu0 %v838, 7
      %v913 = vpop.permute.xlu0 %912
      %914 = vrot.lane.b32.xlu0 %v451, 7
      %v915 = vpop.permute.xlu0 %914
      %916 = vrot.lane.b32.xlu0 %v460, 7
      %v917 = vpop.permute.xlu0 %916
      %918 = vrot.lane.b32.xlu0 %v461, 7
      %v919 = vpop.permute.xlu0 %918
      %920 = vrot.lane.b32.xlu0 %v462, 7
      %v921 = vpop.permute.xlu0 %920
      %922 = vrot.lane.b32.xlu0 %v778, 7
      %v923 = vpop.permute.xlu0 %922
      %vm924 = vcmask 56320
      %v925 = vsel %vm924, %v865, %v867
      %v926 = vsel %vm924, %v867, %v869
      %v927 = vsel %vm924, %v869, %v871
      %v928 = vsel %vm924, %v871, %v873
      %v929 = vsel %vm924, %v875, %v877
      %v930 = vsel %vm924, %v877, %v879
      %v931 = vsel %vm924, %v879, %v881
      %v932 = vsel %vm924, %v881, %v883
      %v933 = vsel %vm924, %v885, %v887
      %v934 = vsel %vm924, %v887, %v889
      %v935 = vsel %vm924, %v889, %v891
      %v936 = vsel %vm924, %v891, %v893
      %v937 = vsel %vm924, %v895, %v897
      %v938 = vsel %vm924, %v897, %v899
      %v939 = vsel %vm924, %v899, %v901
      %v940 = vsel %vm924, %v901, %v903
      %v941 = vsel %vm924, %v905, %v907
      %v942 = vsel %vm924, %v907, %v909
      %v943 = vsel %vm924, %v909, %v911
      %v944 = vsel %vm924, %v911, %v913
      %v945 = vsel %vm924, %v915, %v917
      %v946 = vsel %vm924, %v917, %v919
      %v947 = vsel %vm924, %v919, %v921
      %v948 = vsel %vm924, %v921, %v923
      %v969 = vld [vmem:[%s2] sm:$0xff]
      %v971 = vunpack.c.l.b16 %v969
      %v972 = vunpack.c.h.b16 %v969
      %v973 = vpack.c.b16 %v971, %v971
      %v974 = vpack.c.b16 %v972, %v972
      %vm976 = vcmask 719872
      %v978 = vsel %vm976, %v974, 0
      %v981 = vsel %vm538, %v945, 0
      %v984 = vsel %vm538, %v946, 0
      %v987 = vsel %vm538, %v947, 0
      %v990 = vsel %vm538, %v948, 0
      %992 = vmatpush.bf16.msra.mxu0 %v653
      %993 = vmatpush.bf16.msra.mxu0 %v637
      %994 = vmatpush.bf16.msra.mxu0 %v621
      %995 = vmatpush.bf16.msra.mxu0 %v605
      %996 = vmatpush.bf16.msra.mxu0 %v589
      %997 = vmatpush.bf16.msra.mxu0 %v573
      %998 = vmatpush.bf16.msra.mxu0 %v557
      %999 = vmatpush.bf16.msra.mxu0 %v541
      %1000 = vmatmul.bf16.gmra.mxu0 %v973
      %v1001 = vpop.f32.mrf.mxu0
      %v1002 = vadd.f32 0.0, %v1001
      %v1003 = vpop.f32.mrf.mxu0
      %1004 = vdwg.mxu0
      %1005 = vmatpush.bf16.msra.mxu0 0
      %1006 = vmatpush.bf16.msra.mxu0 0
      %1007 = vmatpush.bf16.msra.mxu0 %v981
      %1008 = vmatpush.bf16.msra.mxu0 %v941
      %1009 = vmatpush.bf16.msra.mxu0 %v937
      %1010 = vmatpush.bf16.msra.mxu0 %v933
      %1011 = vmatpush.bf16.msra.mxu0 %v929
      %1012 = vmatpush.bf16.msra.mxu0 %v925
      %1013 = vmatmul.bf16.gmra.mxu0 %v978
      %v1014 = vpop.f32.mrf.mxu0
      %v1015 = vadd.f32 %v1002, %v1014
      %v1016 = vpop.f32.mrf.mxu0
      %1017 = vdwg.mxu0
      %1018 = vmatpush.bf16.msra.mxu0 %v657
      %1019 = vmatpush.bf16.msra.mxu0 %v641
      %1020 = vmatpush.bf16.msra.mxu0 %v625
      %1021 = vmatpush.bf16.msra.mxu0 %v609
      %1022 = vmatpush.bf16.msra.mxu0 %v593
      %1023 = vmatpush.bf16.msra.mxu0 %v577
      %1024 = vmatpush.bf16.msra.mxu0 %v561
      %1025 = vmatpush.bf16.msra.mxu0 %v545
      %1026 = vmatmul.bf16.gmra.mxu0 %v973
      %v1027 = vpop.f32.mrf.mxu0
      %v1028 = vadd.f32 0.0, %v1027
      %v1029 = vpop.f32.mrf.mxu0
      %1030 = vdwg.mxu0
      %1031 = vmatpush.bf16.msra.mxu0 0
      %1032 = vmatpush.bf16.msra.mxu0 0
      %1033 = vmatpush.bf16.msra.mxu0 %v984
      %1034 = vmatpush.bf16.msra.mxu0 %v942
      %1035 = vmatpush.bf16.msra.mxu0 %v938
      %1036 = vmatpush.bf16.msra.mxu0 %v934
      %1037 = vmatpush.bf16.msra.mxu0 %v930
      %1038 = vmatpush.bf16.msra.mxu0 %v926
      %1039 = vmatmul.bf16.gmra.mxu0 %v978
      %v1040 = vpop.f32.mrf.mxu0
      %v1041 = vadd.f32 %v1028, %v1040
      %v1042 = vpop.f32.mrf.mxu0
      %1043 = vdwg.mxu0
      %1044 = vmatpush.bf16.msra.mxu0 %v661
      %1045 = vmatpush.bf16.msra.mxu0 %v645
      %1046 = vmatpush.bf16.msra.mxu0 %v629
      %1047 = vmatpush.bf16.msra.mxu0 %v613
      %1048 = vmatpush.bf16.msra.mxu0 %v597
      %1049 = vmatpush.bf16.msra.mxu0 %v581
      %1050 = vmatpush.bf16.msra.mxu0 %v565
      %1051 = vmatpush.bf16.msra.mxu0 %v549
      %1052 = vmatmul.bf16.gmra.mxu0 %v973
      %v1053 = vpop.f32.mrf.mxu0
      %v1054 = vadd.f32 0.0, %v1053
      %v1055 = vpop.f32.mrf.mxu0
      %1056 = vdwg.mxu0
      %1057 = vmatpush.bf16.msra.mxu0 0
      %1058 = vmatpush.bf16.msra.mxu0 0
      %1059 = vmatpush.bf16.msra.mxu0 %v987
      %1060 = vmatpush.bf16.msra.mxu0 %v943
      %1061 = vmatpush.bf16.msra.mxu0 %v939
      %1062 = vmatpush.bf16.msra.mxu0 %v935
      %1063 = vmatpush.bf16.msra.mxu0 %v931
      %1064 = vmatpush.bf16.msra.mxu0 %v927
      %1065 = vmatmul.bf16.gmra.mxu0 %v978
      %v1066 = vpop.f32.mrf.mxu0
      %v1067 = vadd.f32 %v1054, %v1066
      %v1068 = vpop.f32.mrf.mxu0
      %1069 = vdwg.mxu0
      %1070 = vmatpush.bf16.msra.mxu0 %v665
      %1071 = vmatpush.bf16.msra.mxu0 %v649
      %1072 = vmatpush.bf16.msra.mxu0 %v633
      %1073 = vmatpush.bf16.msra.mxu0 %v617
      %1074 = vmatpush.bf16.msra.mxu0 %v601
      %1075 = vmatpush.bf16.msra.mxu0 %v585
      %1076 = vmatpush.bf16.msra.mxu0 %v569
      %1077 = vmatpush.bf16.msra.mxu0 %v553
      %1078 = vmatmul.bf16.gmra.mxu0 %v973
      %v1079 = vpop.f32.mrf.mxu0
      %v1080 = vadd.f32 0.0, %v1079
      %v1081 = vpop.f32.mrf.mxu0
      %1082 = vdwg.mxu0
      %1083 = vmatpush.bf16.msra.mxu0 0
      %1084 = vmatpush.bf16.msra.mxu0 0
      %1085 = vmatpush.bf16.msra.mxu0 %v990
      %1086 = vmatpush.bf16.msra.mxu0 %v944
      %1087 = vmatpush.bf16.msra.mxu0 %v940
      %1088 = vmatpush.bf16.msra.mxu0 %v936
      %1089 = vmatpush.bf16.msra.mxu0 %v932
      %1090 = vmatpush.bf16.msra.mxu0 %v928
      %1091 = vmatmul.bf16.gmra.mxu0 %v978
      %v1092 = vpop.f32.mrf.mxu0
      %v1093 = vadd.f32 %v1080, %v1092
      %v1094 = vpop.f32.mrf.mxu0
      %1095 = vdwg.mxu0
      %1096 = vst [vmem:[%s282] sm:$0xff] %v1015
      %1097 = vst [vmem:[%s282 + $0x8] sm:$0xff] %v1041
      %1098 = vst [vmem:[%s282 + $0x10] sm:$0xff] %v1067
      %1099 = vst [vmem:[%s282 + $0x18] sm:$0xff] %v1093
      %v1100 = vld [vmem:[%s276] sm:$0xf]
      %v1102 = vperm.slane %v1100, 0
      %v1103 = vperm.slane %v1100, 1
      %v1104 = vperm.slane %v1100, 2
      %v1105 = vperm.slane %v1100, 3
      %v1110 = vmul.f32 %v1015, %v1102
      %v1111 = vmul.f32 %v1041, %v1103
      %v1112 = vmul.f32 %v1067, %v1104
      %v1113 = vmul.f32 %v1093, %v1105
      %v1114 = vadd.f32 %v1110, %v1111
      %v1115 = vadd.f32 %v1114, %v1112
      %v1116 = vadd.f32 %v1115, %v1113
      %1117 = vadd.xlane.f32.xlu0 %v1116
      %v1118 = vpop.xlane.xlu0 %1117
      %v1119 = vmul.f32 %v1110, %v1015
      %v1120 = vmul.f32 %v1111, %v1041
      %v1121 = vmul.f32 %v1112, %v1067
      %v1122 = vmul.f32 %v1113, %v1093
      %v1123 = vadd.f32 %v1119, %v1120
      %v1124 = vadd.f32 %v1123, %v1121
      %v1125 = vadd.f32 %v1124, %v1122
      %1126 = vadd.xlane.f32.xlu0 %v1125
      %v1127 = vpop.xlane.xlu0 %1126
      %vm1128 = vcmask 7168
      %1129 = vst.msk [vmem:[%s288] sm:$0xff] %vm1128, %v1118
      %1130 = vst.msk [vmem:[%s288 + $0x8] sm:$0xff] %vm1128, %v1127
      %s1131 = smul.u32 4, %s17
      %p1132 = scmp.lt.s32.totalorder %s1131, 15
      %s1133 = scalar_select %p1132, %s1131, 15
      %s1134 = smul.addr %s1133, 8
      %s1135 = scalar_lea.vmem %s4, %s1134
      %p1136 = scmp.lt.s32.totalorder %s17, 3
      %s1137 = scalar_select %p1136, %s17, 3
      %s1138 = smul.addr %s1137, 2
      %s1139 = smul.addr %s1138, 8
      %s1140 = scalar_lea.vmem %s5, %s1139
      // Predicated region
      $region37: #{double_conv3d.6} parent=35 // pred_check
        %p1141 = pneg %p136
      $region38: #{double_conv3d.6} parent=35 // pred_check_branch
        %1143 = sbr.rel (%p1141) target = $region40
      $region39: #{double_conv3d.6} parent=35 // pred_region
        %s1144 = smul.u32 4, %s17
      $region40: #{double_conv3d.6} parent=35 // pred_fallthru
        _
      // Predicated region
      $region41: #{double_conv3d.6} parent=35 // pred_check
        %p1145 = pneg %p162
      $region42: #{double_conv3d.6} parent=35 // pred_check_branch
        %1147 = sbr.rel (%p1145) target = $region44
      $region43: #{double_conv3d.6} parent=35 // pred_region
        _
      $region44: #{double_conv3d.6} parent=35 // pred_fallthru
        _
    $region36: #{double_conv3d.6} parent=5 // pred_fallthru
      _
    %p1148 = scmp.le.s32.totalorder 2, %s12
    // Predicated region
    $region45: #{double_conv3d.6} parent=5 // pred_check
      %p1149 = pneg %p1148
    $region46: #{double_conv3d.6} parent=5 // pred_check_branch
      %1151 = sbr.rel (%p1149) target = $region48
    $region47: #{double_conv3d.6} parent=5 // pred_region
      %s1152 = ssub.s32 %s12, 2
      // Predicated region
      $region49: #{double_conv3d.6} parent=47 // pred_check
        %p1153 = pneg %p142
      $region50: #{double_conv3d.6} parent=47 // pred_check_branch
        %1155 = sbr.rel (%p1153) target = $region52
      $region51: #{double_conv3d.6} parent=47 // pred_region
        %s1156 = smul.u32 4, %s18
        %p1157 = scmp.lt.s32.totalorder %s1156, 15
        %s1158 = scalar_select %p1157, %s1156, 15
        %s1159 = smul.addr %s1158, 8
        %s1160 = scalar_lea.vmem %s4, %s1159
      $region52: #{double_conv3d.6} parent=47 // pred_fallthru
        _
      // Predicated region
      $region53: #{double_conv3d.6} parent=47 // pred_check
        %p1161 = pneg %p168
      $region54: #{double_conv3d.6} parent=47 // pred_check_branch
        %1163 = sbr.rel (%p1161) target = $region56
      $region55: #{double_conv3d.6} parent=47 // pred_region
        %p1164 = scmp.lt.s32.totalorder %s18, 3
        %s1165 = scalar_select %p1164, %s18, 3
        %s1166 = smul.addr %s1165, 2
        %s1167 = smul.addr %s1166, 8
        %s1168 = scalar_lea.vmem %s5, %s1167
      $region56: #{double_conv3d.6} parent=47 // pred_fallthru
        _
    $region48: #{double_conv3d.6} parent=5 // pred_fallthru
      _
  $region6: #{double_conv3d.6} parent=0 // loop_footer
    %s16 = sadd.s32 1, %s12
  $region7: #{double_conv3d.6} parent=0 // loop_footer_branch
    %11 = sbr.rel target = $region3
  $region8: #{double_conv3d.6} parent=0 // loop_exit
    _

// kernel: double_conv3d.7
$region0: #{double_conv3d.7}
  #allocation0 [shape = 'u32[]', space=smem, size = 0x4, offset = 0x4, fixed_abs, tag = 'smem constant byte address 0x4 - core index']
  #allocation1 [shape = 'u32[72,128]{1,0:T(1,128)}', space=vmem, size = 0x9000, scoped, tag = 'internal scratch']
  %s0 = inlined_call_operand.vmem [shape: f32[8,2048], index: 0, kind: input, shape index: {}]
  %s1 = inlined_call_operand.vmem [shape: f32[8,1], index: 1, kind: input, shape index: {}]
  %s2 = inlined_call_operand.vmem [shape: f32[8,1], index: 2, kind: input, shape index: {}]
  %s3 = inlined_call_operand.vmem [shape: f32[8,2048], index: 3, kind: output, shape index: {}]
  %s4 = sld [smem:[#allocation0]]
  $region22: #{double_conv3d.7} parent=0
    _
  %s6 = ssub.s32 1, %s4
  %s7 = scalar_select 0, %s6, %s4
  // Predicated region
  $region2: #{double_conv3d.7} parent=0 // pred_check
    _
  $region3: #{double_conv3d.7} parent=0 // pred_check_branch
    %9 = sbr.rel (0) target = $region5
  $region4: #{double_conv3d.7} parent=0 // pred_region
    _
  $region5: #{double_conv3d.7} parent=0 // pred_fallthru
    _
  // Predicated region
  $region6: #{double_conv3d.7} parent=0 // pred_check
    _
  $region7: #{double_conv3d.7} parent=0 // pred_check_branch
    %11 = sbr.rel (0) target = $region9
  $region8: #{double_conv3d.7} parent=0 // pred_region
    _
  $region9: #{double_conv3d.7} parent=0 // pred_fallthru
    _
  // Predicated region
  $region10: #{double_conv3d.7} parent=0 // pred_check
    _
  $region11: #{double_conv3d.7} parent=0 // pred_check_branch
    %13 = sbr.rel (0) target = $region13
  $region12: #{double_conv3d.7} parent=0 // pred_region
    _
  $region13: #{double_conv3d.7} parent=0 // pred_fallthru
    _
  %v14 = vld [vmem:[%s0] sm:$0xff]
  %v15 = vld [vmem:[%s0 + $0x8] sm:$0xff]
  %v16 = vld [vmem:[%s0 + $0x10] sm:$0xff]
  %v17 = vld [vmem:[%s0 + $0x18] sm:$0xff]
  %v18 = vld [vmem:[%s0 + $0x20] sm:$0xff]
  %v19 = vld [vmem:[%s0 + $0x28] sm:$0xff]
  %v20 = vld [vmem:[%s0 + $0x30] sm:$0xff]
  %v21 = vld [vmem:[%s0 + $0x38] sm:$0xff]
  %v22 = vld [vmem:[%s0 + $0x40] sm:$0xff]
  %v23 = vld [vmem:[%s0 + $0x48] sm:$0xff]
  %v24 = vld [vmem:[%s0 + $0x50] sm:$0xff]
  %v25 = vld [vmem:[%s0 + $0x58] sm:$0xff]
  %v26 = vld [vmem:[%s0 + $0x60] sm:$0xff]
  %v27 = vld [vmem:[%s0 + $0x68] sm:$0xff]
  %v28 = vld [vmem:[%s0 + $0x70] sm:$0xff]
  %v29 = vld [vmem:[%s0 + $0x78] sm:$0xff]
  %v30 = vld [vmem:[%s1] sm:$0xff]
  %32 = vset.pattern.permute.xlu0 0
  %33 = vperm.xlu0 %32, %v30
  %v34 = vpop.permute.xlu0 %33
  %v36 = vmul.f32 %v14, %v34
  %v37 = vmul.f32 %v15, %v34
  %v38 = vmul.f32 %v16, %v34
  %v39 = vmul.f32 %v17, %v34
  %v40 = vmul.f32 %v18, %v34
  %v41 = vmul.f32 %v19, %v34
  %v42 = vmul.f32 %v20, %v34
  %v43 = vmul.f32 %v21, %v34
  %v44 = vmul.f32 %v22, %v34
  %v45 = vmul.f32 %v23, %v34
  %v46 = vmul.f32 %v24, %v34
  %v47 = vmul.f32 %v25, %v34
  %v48 = vmul.f32 %v26, %v34
  %v49 = vmul.f32 %v27, %v34
  %v50 = vmul.f32 %v28, %v34
  %v51 = vmul.f32 %v29, %v34
  %v52 = vld [vmem:[%s2] sm:$0xff]
  %54 = vset.pattern.permute.xlu0 0
  %55 = vperm.xlu0 %54, %v52
  %v56 = vpop.permute.xlu0 %55
  %v58 = vadd.f32 %v36, %v56
  %v59 = vadd.f32 %v37, %v56
  %v60 = vadd.f32 %v38, %v56
  %v61 = vadd.f32 %v39, %v56
  %v62 = vadd.f32 %v40, %v56
  %v63 = vadd.f32 %v41, %v56
  %v64 = vadd.f32 %v42, %v56
  %v65 = vadd.f32 %v43, %v56
  %v66 = vadd.f32 %v44, %v56
  %v67 = vadd.f32 %v45, %v56
  %v68 = vadd.f32 %v46, %v56
  %v69 = vadd.f32 %v47, %v56
  %v70 = vadd.f32 %v48, %v56
  %v71 = vadd.f32 %v49, %v56
  %v72 = vadd.f32 %v50, %v56
  %v73 = vadd.f32 %v51, %v56
  %v74 = vmax.f32 %v58, 0.0
  %v75 = vmax.f32 %v59, 0.0
  %v76 = vmax.f32 %v60, 0.0
  %v77 = vmax.f32 %v61, 0.0
  %v78 = vmax.f32 %v62, 0.0
  %v79 = vmax.f32 %v63, 0.0
  %v80 = vmax.f32 %v64, 0.0
  %v81 = vmax.f32 %v65, 0.0
  %v82 = vmax.f32 %v66, 0.0
  %v83 = vmax.f32 %v67, 0.0
  %v84 = vmax.f32 %v68, 0.0
  %v85 = vmax.f32 %v69, 0.0
  %v86 = vmax.f32 %v70, 0.0
  %v87 = vmax.f32 %v71, 0.0
  %v88 = vmax.f32 %v72, 0.0
  %v89 = vmax.f32 %v73, 0.0
  %90 = vst [vmem:[%s3] sm:$0xff] %v74
  %91 = vst [vmem:[%s3 + $0x8] sm:$0xff] %v75
  %92 = vst [vmem:[%s3 + $0x10] sm:$0xff] %v76
  %93 = vst [vmem:[%s3 + $0x18] sm:$0xff] %v77
  %94 = vst [vmem:[%s3 + $0x20] sm:$0xff] %v78
  %95 = vst [vmem:[%s3 + $0x28] sm:$0xff] %v79
  %96 = vst [vmem:[%s3 + $0x30] sm:$0xff] %v80
  %97 = vst [vmem:[%s3 + $0x38] sm:$0xff] %v81
  %98 = vst [vmem:[%s3 + $0x40] sm:$0xff] %v82
  %99 = vst [vmem:[%s3 + $0x48] sm:$0xff] %v83
  %100 = vst [vmem:[%s3 + $0x50] sm:$0xff] %v84
  %101 = vst [vmem:[%s3 + $0x58] sm:$0xff] %v85
  %102 = vst [vmem:[%s3 + $0x60] sm:$0xff] %v86
  %103 = vst [vmem:[%s3 + $0x68] sm:$0xff] %v87
  %104 = vst [vmem:[%s3 + $0x70] sm:$0xff] %v88
  %105 = vst [vmem:[%s3 + $0x78] sm:$0xff] %v89
  // Predicated region
  $region14: #{double_conv3d.7} parent=0 // pred_check
    _
  $region15: #{double_conv3d.7} parent=0 // pred_check_branch
    %107 = sbr.rel (0) target = $region17
  $region16: #{double_conv3d.7} parent=0 // pred_region
    _
  $region17: #{double_conv3d.7} parent=0 // pred_fallthru
    _
  // Predicated region
  $region18: #{double_conv3d.7} parent=0 // pred_check
    _
  $region19: #{double_conv3d.7} parent=0 // pred_check_branch
    %109 = sbr.rel (0) target = $region21
  $region20: #{double_conv3d.7} parent=0 // pred_region
    _
  $region21: #{double_conv3d.7} parent=0 // pred_fallthru
    _

</llo_original>
